<compile_context>
chip_gen: v6e
topology: v6e:2x2x1
jax: 0.10.0
libtpu: 0.0.40
codegen_flags: <defaults>
</compile_context>

<pallas_src>
import jax
import jax.numpy as jnp
from jax.experimental import pallas as pl
from jax.experimental.pallas import tpu as pltpu

_LANE = 128      # lane width (last dim)
_SUBLANE = 8     # f32 sublane count (second-to-last dim)


def _round_up(x, m):
    return ((x + m - 1) // m) * m


def _decoder_kernel(x_ref,
                    w1_ref, b1_ref,
                    w2_ref, b2_ref,
                    w3_ref, b3_ref,
                    w4_ref, b4_ref,
                    w5_ref, b5_ref,
                    o_ref):
    """Fused MLP: 4x (Linear + ReLU) + final Linear.

    Weights are bf16 (native MXU rate), accumulation is f32, bias add and
    ReLU are done in f32 on the VPU (free under MXU slack).
    """

    def layer(h, w_ref, b_ref, relu):
        acc = jnp.dot(h.astype(jnp.bfloat16), w_ref[...],
                      preferred_element_type=jnp.float32)
        acc = acc + b_ref[...]
        return jnp.maximum(acc, 0.0) if relu else acc

    h = x_ref[...]                       # f32 input tile (no redundant cast)
    h = layer(h, w1_ref, b1_ref, True)   # E   -> 256
    h = layer(h, w2_ref, b2_ref, True)   # 256 -> 512
    h = layer(h, w3_ref, b3_ref, True)   # 512 -> 512
    h = layer(h, w4_ref, b4_ref, True)   # 512 -> 256
    h = layer(h, w5_ref, b5_ref, False)  # 256 -> OUT (no activation)
    o_ref[...] = h.astype(o_ref.dtype)


def _constant_block_kwargs():
    """pipeline_mode=pl.Buffered(1) for blocks whose index_map is constant."""
    if hasattr(pl, "Buffered"):
        try:
            pl.BlockSpec((8, 128), lambda i: (0, 0),
                         pipeline_mode=pl.Buffered(1))
            return {"pipeline_mode": pl.Buffered(1)}
        except (TypeError, ValueError):
            pass
    return {}


def _pick_batch_tile(B, batch_tile):
    B8 = _round_up(max(B, 1), _SUBLANE)
    tb = min(_round_up(batch_tile, _SUBLANE), B8)
    # Keep at least 2 grid steps on large batches so the "parallel" axis can
    # be sharded across the 2 TensorCores of a v7x chip.
    if tb == B8 and B8 >= 2 * _LANE:
        tb = _round_up(B8 // 2, _SUBLANE)
    return tb


def decoder_forward(embedding, params, *, batch_tile=256):
    """Run the fused Decoder MLP with a Pallas kernel.

    embedding: [B, E] float32
    params: dict with w1..w5 ([in, out]) and b1..b5 ([1, out]) float32
    """
    B, E = embedding.shape
    out_dim = params["w5"].shape[1]

    # ---- pad feature dims to multiples of 128 (lane-dense MXU tiles) ------
    dims = [E] + [params[f"w{i}"].shape[1] for i in range(1, 6)]
    pdims = [_round_up(d, _LANE) for d in dims]

    ws, bs = [], []
    for li in range(1, 6):
        w = params[f"w{li}"]
        b = params[f"b{li}"].reshape(1, -1)
        pin, pout = pdims[li - 1], pdims[li]
        w = jnp.pad(w, ((0, pin - w.shape[0]), (0, pout - w.shape[1])))
        b = jnp.pad(b, ((0, 0), (0, pout - b.shape[1])))
        ws.append(w.astype(jnp.bfloat16))   # bf16 MXU inputs
        bs.append(b.astype(jnp.float32))    # f32 bias add

    # ---- pad batch and embedding dim of the input --------------------------
    tb = _pick_batch_tile(B, batch_tile)
    Bp = _round_up(B, tb)
    x = jnp.pad(embedding.astype(jnp.float32),
                ((0, Bp - B), (0, pdims[0] - E)))

    grid = (Bp // tb,)

    def x_map(i):
        return (i, 0)

    def rep_map(i):
        return (0, 0)

    const_kwargs = _constant_block_kwargs()

    in_specs = [pl.BlockSpec((tb, pdims[0]), x_map)]
    args = [x]
    for w, b in zip(ws, bs):
        in_specs.append(pl.BlockSpec(w.shape, rep_map, **const_kwargs))
        in_specs.append(pl.BlockSpec(b.shape, rep_map, **const_kwargs))
        args.extend([w, b])

    out_specs = pl.BlockSpec((tb, pdims[-1]), x_map)

    fn = pl.pallas_call(
        _decoder_kernel,
        out_shape=jax.ShapeDtypeStruct((Bp, pdims[-1]), jnp.float32),
        grid_spec=pltpu.PrefetchScalarGridSpec(
            num_scalar_prefetch=0,
            grid=grid,
            in_specs=in_specs,
            out_specs=out_specs,
        ),
        compiler_params=pltpu.CompilerParams(
            dimension_semantics=("parallel",),
            vmem_limit_bytes=32 * 1024 * 1024,
        ),
    )
    out = fn(*args)
    return out[:B, :out_dim].astype(embedding.dtype)


def init_decoder_params(key, embedding_dim, output_dim):
    """Deterministic synthetic init mirroring nn.Linear defaults.

    Weights are stored transposed: [in_features, out_features].
    """
    dims = [embedding_dim, 250, 500, 500, 250, output_dim]
    params = {}
    for li in range(5):
        fan_in, fan_out = dims[li], dims[li + 1]
        key, kw, kb = jax.random.split(key, 3)
        bound = 1.0 / jnp.sqrt(jnp.float32(fan_in))
        params[f"w{li + 1}"] = jax.random.uniform(
            kw, (fan_in, fan_out), jnp.float32, minval=-bound, maxval=bound)
        params[f"b{li + 1}"] = jax.random.uniform(
            kb, (1, fan_out), jnp.float32, minval=-bound, maxval=bound)
    return params


def decoder_reference_f32(embedding, params):
    """Pure-JAX f32 reference (module semantics)."""
    h = embedding
    for li in range(1, 5):
        h = jnp.maximum(h @ params[f"w{li}"] + params[f"b{li}"], 0.0)
    return h @ params["w5"] + params["b5"]


def decoder_reference_bf16(embedding, params):
    """Reference matching the kernel's numerics: bf16 matmul inputs, f32 acc."""
    h = embedding.astype(jnp.float32)
    for li in range(1, 6):
        w = params[f"w{li}"].astype(jnp.bfloat16)
        h = jnp.dot(h.astype(jnp.bfloat16), w,
                    preferred_element_type=jnp.float32) + params[f"b{li}"]
        if li < 5:
            h = jnp.maximum(h, 0.0)
    return h


if __name__ == "__main__":
    EMBED_DIM = 32
    OUTPUT_DIM = 64
    BATCH = 16

    key = jax.random.PRNGKey(0)
    key, xkey = jax.random.split(key)
    params = init_decoder_params(key, EMBED_DIM, OUTPUT_DIM)
    embedding = jax.random.normal(xkey, (BATCH, EMBED_DIM), jnp.float32)

    out = decoder_forward(embedding, params)
    out = jax.block_until_ready(out)
    assert out.shape == (BATCH, OUTPUT_DIM)

    ref_matched = decoder_reference_bf16(embedding, params)
    assert jnp.allclose(out, ref_matched, atol=2e-2, rtol=2e-2), \
        "mismatch vs bf16-matched reference"

    ref_f32 = decoder_reference_f32(embedding, params)
    assert jnp.allclose(out, ref_f32, atol=1e-1, rtol=1e-1), \
        "mismatch vs f32 module reference"

    print("KERNEL_OK")
</pallas_src>

<mosaic_0001>
module attributes {stable_mosaic.version = 11 : i64} {
  func.func @_decoder_kernel(%arg0: i32, %arg1: memref<16x128xf32, #tpu.memory_space<vmem>>, %arg2: memref<128x256xbf16, #tpu.memory_space<vmem>>, %arg3: memref<1x256xf32, #tpu.memory_space<vmem>>, %arg4: memref<256x512xbf16, #tpu.memory_space<vmem>>, %arg5: memref<1x512xf32, #tpu.memory_space<vmem>>, %arg6: memref<512x512xbf16, #tpu.memory_space<vmem>>, %arg7: memref<1x512xf32, #tpu.memory_space<vmem>>, %arg8: memref<512x256xbf16, #tpu.memory_space<vmem>>, %arg9: memref<1x256xf32, #tpu.memory_space<vmem>>, %arg10: memref<256x128xbf16, #tpu.memory_space<vmem>>, %arg11: memref<1x128xf32, #tpu.memory_space<vmem>>, %arg12: memref<16x128xf32, #tpu.memory_space<vmem>>) attributes {dimension_semantics = [#tpu.dimension_semantics<parallel>], iteration_bounds = array<i64: 1>, scalar_prefetch = 0 : i64, scratch_operands = 0 : i64, tpu.core_type = #tpu.core_type<tc>, window_params = [{transform_indices = @transform_0, window_bounds = array<i64: 16, 128>}, {pipeline_mode = #tpu.pipeline_mode<synchronous>, transform_indices = @transform_1, window_bounds = array<i64: 128, 256>}, {pipeline_mode = #tpu.pipeline_mode<synchronous>, transform_indices = @transform_2, window_bounds = array<i64: 1, 256>}, {pipeline_mode = #tpu.pipeline_mode<synchronous>, transform_indices = @transform_3, window_bounds = array<i64: 256, 512>}, {pipeline_mode = #tpu.pipeline_mode<synchronous>, transform_indices = @transform_4, window_bounds = array<i64: 1, 512>}, {pipeline_mode = #tpu.pipeline_mode<synchronous>, transform_indices = @transform_5, window_bounds = array<i64: 512, 512>}, {pipeline_mode = #tpu.pipeline_mode<synchronous>, transform_indices = @transform_6, window_bounds = array<i64: 1, 512>}, {pipeline_mode = #tpu.pipeline_mode<synchronous>, transform_indices = @transform_7, window_bounds = array<i64: 512, 256>}, {pipeline_mode = #tpu.pipeline_mode<synchronous>, transform_indices = @transform_8, window_bounds = array<i64: 1, 256>}, {pipeline_mode = #tpu.pipeline_mode<synchronous>, transform_indices = @transform_9, window_bounds = array<i64: 256, 128>}, {pipeline_mode = #tpu.pipeline_mode<synchronous>, transform_indices = @transform_10, window_bounds = array<i64: 1, 128>}, {transform_indices = @transform_11, window_bounds = array<i64: 16, 128>}]} {
    %c0 = arith.constant 0 : index
    %c0_0 = arith.constant 0 : index
    %0 = vector.load %arg1[%c0, %c0_0] : memref<16x128xf32, #tpu.memory_space<vmem>>, vector<16x128xf32>
    %1 = arith.truncf %0 : vector<16x128xf32> to vector<16x128xbf16>
    %c0_1 = arith.constant 0 : index
    %c0_2 = arith.constant 0 : index
    %2 = vector.load %arg2[%c0_1, %c0_2] : memref<128x256xbf16, #tpu.memory_space<vmem>>, vector<128x256xbf16>
    %cst = arith.constant dense<0.000000e+00> : vector<16x256xf32>
    %3 = tpu.matmul %1, %2, %cst {dimension_numbers = #tpu.dot_dimension_numbers<[1], [0], [0], [1], [0, 0, 1, 1], [], []>} : vector<16x128xbf16>, vector<128x256xbf16>, vector<16x256xf32> -> vector<16x256xf32>
    %c0_3 = arith.constant 0 : index
    %c0_4 = arith.constant 0 : index
    %4 = vector.load %arg3[%c0_3, %c0_4] : memref<1x256xf32, #tpu.memory_space<vmem>>, vector<1x256xf32>
    %5 = vector.broadcast %4 : vector<1x256xf32> to vector<16x256xf32>
    %6 = arith.addf %3, %5 : vector<16x256xf32>
    %cst_5 = arith.constant 0.000000e+00 : f32
    %7 = vector.broadcast %cst_5 : f32 to vector<16x256xf32>
    %8 = arith.maximumf %6, %7 : vector<16x256xf32>
    %9 = arith.truncf %8 : vector<16x256xf32> to vector<16x256xbf16>
    %c0_6 = arith.constant 0 : index
    %c0_7 = arith.constant 0 : index
    %10 = vector.load %arg4[%c0_6, %c0_7] : memref<256x512xbf16, #tpu.memory_space<vmem>>, vector<256x512xbf16>
    %cst_8 = arith.constant dense<0.000000e+00> : vector<16x512xf32>
    %11 = tpu.matmul %9, %10, %cst_8 {dimension_numbers = #tpu.dot_dimension_numbers<[1], [0], [0], [1], [0, 0, 1, 1], [], []>} : vector<16x256xbf16>, vector<256x512xbf16>, vector<16x512xf32> -> vector<16x512xf32>
    %c0_9 = arith.constant 0 : index
    %c0_10 = arith.constant 0 : index
    %12 = vector.load %arg5[%c0_9, %c0_10] : memref<1x512xf32, #tpu.memory_space<vmem>>, vector<1x512xf32>
    %13 = vector.broadcast %12 : vector<1x512xf32> to vector<16x512xf32>
    %14 = arith.addf %11, %13 : vector<16x512xf32>
    %cst_11 = arith.constant 0.000000e+00 : f32
    %15 = vector.broadcast %cst_11 : f32 to vector<16x512xf32>
    %16 = arith.maximumf %14, %15 : vector<16x512xf32>
    %17 = arith.truncf %16 : vector<16x512xf32> to vector<16x512xbf16>
    %c0_12 = arith.constant 0 : index
    %c0_13 = arith.constant 0 : index
    %18 = vector.load %arg6[%c0_12, %c0_13] : memref<512x512xbf16, #tpu.memory_space<vmem>>, vector<512x512xbf16>
    %cst_14 = arith.constant dense<0.000000e+00> : vector<16x512xf32>
    %19 = tpu.matmul %17, %18, %cst_14 {dimension_numbers = #tpu.dot_dimension_numbers<[1], [0], [0], [1], [0, 0, 1, 1], [], []>} : vector<16x512xbf16>, vector<512x512xbf16>, vector<16x512xf32> -> vector<16x512xf32>
    %c0_15 = arith.constant 0 : index
    %c0_16 = arith.constant 0 : index
    %20 = vector.load %arg7[%c0_15, %c0_16] : memref<1x512xf32, #tpu.memory_space<vmem>>, vector<1x512xf32>
    %21 = vector.broadcast %20 : vector<1x512xf32> to vector<16x512xf32>
    %22 = arith.addf %19, %21 : vector<16x512xf32>
    %cst_17 = arith.constant 0.000000e+00 : f32
    %23 = vector.broadcast %cst_17 : f32 to vector<16x512xf32>
    %24 = arith.maximumf %22, %23 : vector<16x512xf32>
    %25 = arith.truncf %24 : vector<16x512xf32> to vector<16x512xbf16>
    %c0_18 = arith.constant 0 : index
    %c0_19 = arith.constant 0 : index
    %26 = vector.load %arg8[%c0_18, %c0_19] : memref<512x256xbf16, #tpu.memory_space<vmem>>, vector<512x256xbf16>
    %cst_20 = arith.constant dense<0.000000e+00> : vector<16x256xf32>
    %27 = tpu.matmul %25, %26, %cst_20 {dimension_numbers = #tpu.dot_dimension_numbers<[1], [0], [0], [1], [0, 0, 1, 1], [], []>} : vector<16x512xbf16>, vector<512x256xbf16>, vector<16x256xf32> -> vector<16x256xf32>
    %c0_21 = arith.constant 0 : index
    %c0_22 = arith.constant 0 : index
    %28 = vector.load %arg9[%c0_21, %c0_22] : memref<1x256xf32, #tpu.memory_space<vmem>>, vector<1x256xf32>
    %29 = vector.broadcast %28 : vector<1x256xf32> to vector<16x256xf32>
    %30 = arith.addf %27, %29 : vector<16x256xf32>
    %cst_23 = arith.constant 0.000000e+00 : f32
    %31 = vector.broadcast %cst_23 : f32 to vector<16x256xf32>
    %32 = arith.maximumf %30, %31 : vector<16x256xf32>
    %33 = arith.truncf %32 : vector<16x256xf32> to vector<16x256xbf16>
    %c0_24 = arith.constant 0 : index
    %c0_25 = arith.constant 0 : index
    %34 = vector.load %arg10[%c0_24, %c0_25] : memref<256x128xbf16, #tpu.memory_space<vmem>>, vector<256x128xbf16>
    %cst_26 = arith.constant dense<0.000000e+00> : vector<16x128xf32>
    %35 = tpu.matmul %33, %34, %cst_26 {dimension_numbers = #tpu.dot_dimension_numbers<[1], [0], [0], [1], [0, 0, 1, 1], [], []>} : vector<16x256xbf16>, vector<256x128xbf16>, vector<16x128xf32> -> vector<16x128xf32>
    %c0_27 = arith.constant 0 : index
    %c0_28 = arith.constant 0 : index
    %36 = vector.load %arg11[%c0_27, %c0_28] : memref<1x128xf32, #tpu.memory_space<vmem>>, vector<1x128xf32>
    %37 = vector.broadcast %36 : vector<1x128xf32> to vector<16x128xf32>
    %38 = arith.addf %35, %37 : vector<16x128xf32>
    %c0_29 = arith.constant 0 : index
    %c0_30 = arith.constant 0 : index
    %39 = vector.load %arg12[%c0_29, %c0_30] : memref<16x128xf32, #tpu.memory_space<vmem>>, vector<16x128xf32>
    tpu.vector_store %arg12[%c0_29, %c0_30], %38 {strides = array<i32>} : memref<16x128xf32, #tpu.memory_space<vmem>>, vector<16x128xf32>,
    return
  }
  func.func @transform_0(%arg0: i32) -> (i32, i32) {
    %c0_i32 = arith.constant 0 : i32
    %c0_i32_0 = arith.constant 0 : i32
    return %arg0, %c0_i32 : i32, i32
  }
  func.func @transform_1(%arg0: i32) -> (i32, i32) {
    %c0_i32 = arith.constant 0 : i32
    %c0_i32_0 = arith.constant 0 : i32
    %c0_i32_1 = arith.constant 0 : i32
    return %c0_i32, %c0_i32_0 : i32, i32
  }
  func.func @transform_2(%arg0: i32) -> (i32, i32) {
    %c0_i32 = arith.constant 0 : i32
    %c0_i32_0 = arith.constant 0 : i32
    %c0_i32_1 = arith.constant 0 : i32
    return %c0_i32, %c0_i32_0 : i32, i32
  }
  func.func @transform_3(%arg0: i32) -> (i32, i32) {
    %c0_i32 = arith.constant 0 : i32
    %c0_i32_0 = arith.constant 0 : i32
    %c0_i32_1 = arith.constant 0 : i32
    return %c0_i32, %c0_i32_0 : i32, i32
  }
  func.func @transform_4(%arg0: i32) -> (i32, i32) {
    %c0_i32 = arith.constant 0 : i32
    %c0_i32_0 = arith.constant 0 : i32
    %c0_i32_1 = arith.constant 0 : i32
    return %c0_i32, %c0_i32_0 : i32, i32
  }
  func.func @transform_5(%arg0: i32) -> (i32, i32) {
    %c0_i32 = arith.constant 0 : i32
    %c0_i32_0 = arith.constant 0 : i32
    %c0_i32_1 = arith.constant 0 : i32
    return %c0_i32, %c0_i32_0 : i32, i32
  }
  func.func @transform_6(%arg0: i32) -> (i32, i32) {
    %c0_i32 = arith.constant 0 : i32
    %c0_i32_0 = arith.constant 0 : i32
    %c0_i32_1 = arith.constant 0 : i32
    return %c0_i32, %c0_i32_0 : i32, i32
  }
  func.func @transform_7(%arg0: i32) -> (i32, i32) {
    %c0_i32 = arith.constant 0 : i32
    %c0_i32_0 = arith.constant 0 : i32
    %c0_i32_1 = arith.constant 0 : i32
    return %c0_i32, %c0_i32_0 : i32, i32
  }
  func.func @transform_8(%arg0: i32) -> (i32, i32) {
    %c0_i32 = arith.constant 0 : i32
    %c0_i32_0 = arith.constant 0 : i32
    %c0_i32_1 = arith.constant 0 : i32
    return %c0_i32, %c0_i32_0 : i32, i32
  }
  func.func @transform_9(%arg0: i32) -> (i32, i32) {
    %c0_i32 = arith.constant 0 : i32
    %c0_i32_0 = arith.constant 0 : i32
    %c0_i32_1 = arith.constant 0 : i32
    return %c0_i32, %c0_i32_0 : i32, i32
  }
  func.func @transform_10(%arg0: i32) -> (i32, i32) {
    %c0_i32 = arith.constant 0 : i32
    %c0_i32_0 = arith.constant 0 : i32
    %c0_i32_1 = arith.constant 0 : i32
    return %c0_i32, %c0_i32_0 : i32, i32
  }
  func.func @transform_11(%arg0: i32) -> (i32, i32) {
    %c0_i32 = arith.constant 0 : i32
    %c0_i32_0 = arith.constant 0 : i32
    return %arg0, %c0_i32 : i32, i32
  }
}

</mosaic_0001>

<llo_original>
// kernel: tpu_custom_call.1
$region0: #{tpu_custom_call.1}
  #allocation0 [shape = 'u32[]', space=smem, size = 0x4, offset = 0x4, fixed_abs, tag = 'smem constant byte address 0x4 - core index']
  #allocation1 [shape = 'u32[144,128]{1,0:T(1,128)}', space=vmem, size = 0x12000, scoped, tag = 'internal scratch']
  %s0 = inlined_call_operand.hbm [shape: f32[16,128], index: 0, kind: input, shape index: {}]
  %s1 = inlined_call_operand.hbm [shape: bf16[128,256], index: 1, kind: input, shape index: {}]
  %s2 = inlined_call_operand.hbm [shape: f32[1,256], index: 2, kind: input, shape index: {}]
  %s3 = inlined_call_operand.hbm [shape: bf16[256,512], index: 3, kind: input, shape index: {}]
  %s4 = inlined_call_operand.vmem [shape: f32[1,512], index: 4, kind: input, shape index: {}]
  %s5 = inlined_call_operand.hbm [shape: bf16[512,512], index: 5, kind: input, shape index: {}]
  %s6 = inlined_call_operand.vmem [shape: f32[1,512], index: 6, kind: input, shape index: {}]
  %s7 = inlined_call_operand.hbm [shape: bf16[512,256], index: 7, kind: input, shape index: {}]
  %s8 = inlined_call_operand.vmem [shape: f32[1,256], index: 8, kind: input, shape index: {}]
  %s9 = inlined_call_operand.hbm [shape: bf16[256,128], index: 9, kind: input, shape index: {}]
  %s10 = inlined_call_operand.vmem [shape: f32[1,128], index: 10, kind: input, shape index: {}]
  %s11 = inlined_call_operand.hbm [shape: f32[16,128], index: 11, kind: output, shape index: {}]
  %s12 = sld [smem:[#allocation0]]
  $region82: #{tpu_custom_call.1} parent=0
    _
  %s14 = ssub.s32 1, %s12
  %s15 = scalar_select 0, %s14, %s12
  $region1: #{tpu_custom_call.1} parent=0
    #allocation2 [shape = 'u8[8192]{0}', space=vmem, size = 0x2000, scoped, tag = 'input window, operand 0, single buffered']
    #allocation3 [shape = 's32[1]{0}', space=sflag, size = 0x4, scoped, tag = 'scoped memory for tpu_custom_call.1']
    #allocation4 [shape = 's32[1]{0}', space=sflag, size = 0x4, scoped, tag = 'scoped memory for tpu_custom_call.1']
    #allocation5 [shape = 'u8[65536]{0}', space=vmem, size = 0x10000, scoped, tag = 'input window, operand 1, single buffered']
    #allocation6 [shape = 's32[1]{0}', space=sflag, size = 0x4, scoped, tag = 'scoped memory for tpu_custom_call.1']
    #allocation7 [shape = 'u8[1024]{0}', space=vmem, size = 0x400, scoped, tag = 'input window, operand 2, single buffered']
    #allocation8 [shape = 'u8[262144]{0}', space=vmem, size = 0x40000, scoped, tag = 'input window, operand 3, single buffered']
    #allocation9 [shape = 's32[1]{0}', space=sflag, size = 0x4, scoped, tag = 'scoped memory for tpu_custom_call.1']
    #allocation10 [shape = 'u8[524288]{0}', space=vmem, size = 0x80000, scoped, tag = 'input window, operand 5, single buffered']
    #allocation11 [shape = 'u8[262144]{0}', space=vmem, size = 0x40000, scoped, tag = 'input window, operand 7, single buffered']
    #allocation12 [shape = 's32[1]{0}', space=sflag, size = 0x4, scoped, tag = 'scoped memory for tpu_custom_call.1']
    #allocation13 [shape = 'u8[65536]{0}', space=vmem, size = 0x10000, scoped, tag = 'input window, operand 9, single buffered']
    #allocation14 [shape = 'u8[8192]{0}', space=vmem, size = 0x2000, scoped, tag = 'output window, operand 0, single buffered']
    %16 = vsyncpa [#allocation3], 0
    %17 = vsyncpa [#allocation6], 0
    %18 = vsyncpa [#allocation9], 0
    %19 = vsyncpa [#allocation12], 0
    %20 = vsyncpa [#allocation4], 0
    // Predicated region
    $region2: #{tpu_custom_call.1} parent=1 // pred_check
      _
    $region3: #{tpu_custom_call.1} parent=1 // pred_check_branch
      %22 = sbr.rel (0) target = $region5
    $region4: #{tpu_custom_call.1} parent=1 // pred_region
      %s24 = ssub.s32 256, 256
      %25 = vsyncadd [#allocation3], %s24
      %s26 = sshll.u32 [#allocation2], 4
      %s27 = int_to_ptr.vmem [resolvable:$true] %s26
      %32 = dma.hbm_to_vmem [thread:$0]  %s0, 256, %s27, [#allocation3], 128, 128, 8
    $region5: #{tpu_custom_call.1} parent=1 // pred_fallthru
      _
    // Predicated region
    $region6: #{tpu_custom_call.1} parent=1 // pred_check
      _
    $region7: #{tpu_custom_call.1} parent=1 // pred_check_branch
      %34 = sbr.rel (0) target = $region9
    $region8: #{tpu_custom_call.1} parent=1 // pred_region
      %s36 = ssub.s32 2048, 2048
      %37 = vsyncadd [#allocation6], %s36
      %s38 = sshll.u32 [#allocation5], 4
      %s39 = int_to_ptr.vmem [resolvable:$true] %s38
      %44 = dma.hbm_to_vmem [thread:$0]  %s1, 2048, %s39, [#allocation6], 128, 128, 8
    $region9: #{tpu_custom_call.1} parent=1 // pred_fallthru
      _
    // Predicated region
    $region10: #{tpu_custom_call.1} parent=1 // pred_check
      _
    $region11: #{tpu_custom_call.1} parent=1 // pred_check_branch
      %46 = sbr.rel (0) target = $region13
    $region12: #{tpu_custom_call.1} parent=1 // pred_region
      %s48 = ssub.s32 32, 32
      %49 = vsyncadd [#allocation6], %s48
      %s51 = sshll.u32 [#allocation7], 4
      %s52 = int_to_ptr.vmem [resolvable:$true] %s51
      %54 = dma.hbm_to_vmem [thread:$0]  %s2, 32, %s52, [#allocation6]
    $region13: #{tpu_custom_call.1} parent=1 // pred_fallthru
      _
    // Predicated region
    $region14: #{tpu_custom_call.1} parent=1 // pred_check
      _
    $region15: #{tpu_custom_call.1} parent=1 // pred_check_branch
      %56 = sbr.rel (0) target = $region17
    $region16: #{tpu_custom_call.1} parent=1 // pred_region
      %s58 = ssub.s32 8192, 8192
      %59 = vsyncadd [#allocation9], %s58
      %s60 = sshll.u32 [#allocation8], 4
      %s61 = int_to_ptr.vmem [resolvable:$true] %s60
      %66 = dma.hbm_to_vmem [thread:$0]  %s3, 8192, %s61, [#allocation9], 256, 256, 16
    $region17: #{tpu_custom_call.1} parent=1 // pred_fallthru
      _
    // Predicated region
    $region18: #{tpu_custom_call.1} parent=1 // pred_check
      _
    $region19: #{tpu_custom_call.1} parent=1 // pred_check_branch
      %68 = sbr.rel (0) target = $region21
    $region20: #{tpu_custom_call.1} parent=1 // pred_region
      _
    $region21: #{tpu_custom_call.1} parent=1 // pred_fallthru
      _
    // Predicated region
    $region22: #{tpu_custom_call.1} parent=1 // pred_check
      _
    $region23: #{tpu_custom_call.1} parent=1 // pred_check_branch
      %70 = sbr.rel (0) target = $region25
    $region24: #{tpu_custom_call.1} parent=1 // pred_region
      %s72 = ssub.s32 16384, 16384
      %73 = vsyncadd [#allocation9], %s72
      %s74 = sshll.u32 [#allocation10], 4
      %s75 = int_to_ptr.vmem [resolvable:$true] %s74
      %80 = dma.hbm_to_vmem [thread:$0]  %s5, 16384, %s75, [#allocation9], 256, 256, 16
    $region25: #{tpu_custom_call.1} parent=1 // pred_fallthru
      _
    // Predicated region
    $region26: #{tpu_custom_call.1} parent=1 // pred_check
      _
    $region27: #{tpu_custom_call.1} parent=1 // pred_check_branch
      %82 = sbr.rel (0) target = $region29
    $region28: #{tpu_custom_call.1} parent=1 // pred_region
      _
    $region29: #{tpu_custom_call.1} parent=1 // pred_fallthru
      _
    // Predicated region
    $region30: #{tpu_custom_call.1} parent=1 // pred_check
      _
    $region31: #{tpu_custom_call.1} parent=1 // pred_check_branch
      %84 = sbr.rel (0) target = $region33
    $region32: #{tpu_custom_call.1} parent=1 // pred_region
      %s86 = ssub.s32 8192, 8192
      %87 = vsyncadd [#allocation12], %s86
      %s88 = sshll.u32 [#allocation11], 4
      %s89 = int_to_ptr.vmem [resolvable:$true] %s88
      %94 = dma.hbm_to_vmem [thread:$0]  %s7, 8192, %s89, [#allocation12], 128, 128, 8
    $region33: #{tpu_custom_call.1} parent=1 // pred_fallthru
      _
    // Predicated region
    $region34: #{tpu_custom_call.1} parent=1 // pred_check
      _
    $region35: #{tpu_custom_call.1} parent=1 // pred_check_branch
      %96 = sbr.rel (0) target = $region37
    $region36: #{tpu_custom_call.1} parent=1 // pred_region
      _
    $region37: #{tpu_custom_call.1} parent=1 // pred_fallthru
      _
    // Predicated region
    $region38: #{tpu_custom_call.1} parent=1 // pred_check
      _
    $region39: #{tpu_custom_call.1} parent=1 // pred_check_branch
      %98 = sbr.rel (0) target = $region41
    $region40: #{tpu_custom_call.1} parent=1 // pred_region
      %s100 = ssub.s32 2048, 2048
      %101 = vsyncadd [#allocation12], %s100
      %s102 = sshll.u32 [#allocation13], 4
      %s103 = int_to_ptr.vmem [resolvable:$true] %s102
      %108 = dma.hbm_to_vmem [thread:$0]  %s9, 2048, %s103, [#allocation12], 64, 64, 4
    $region41: #{tpu_custom_call.1} parent=1 // pred_fallthru
      _
    // Predicated region
    $region42: #{tpu_custom_call.1} parent=1 // pred_check
      _
    $region43: #{tpu_custom_call.1} parent=1 // pred_check_branch
      %110 = sbr.rel (0) target = $region45
    $region44: #{tpu_custom_call.1} parent=1 // pred_region
      _
    $region45: #{tpu_custom_call.1} parent=1 // pred_fallthru
      _
    // Predicated region
    $region46: #{tpu_custom_call.1} parent=1 // pred_check
      _
    $region47: #{tpu_custom_call.1} parent=1 // pred_check_branch
      %112 = sbr.rel (0) target = $region49
    $region48: #{tpu_custom_call.1} parent=1 // pred_region
      %113 = dma.done [#allocation3], 256
    $region49: #{tpu_custom_call.1} parent=1 // pred_fallthru
      _
    // Predicated region
    $region50: #{tpu_custom_call.1} parent=1 // pred_check
      _
    $region51: #{tpu_custom_call.1} parent=1 // pred_check_branch
      %115 = sbr.rel (0) target = $region53
    $region52: #{tpu_custom_call.1} parent=1 // pred_region
      %116 = dma.done [#allocation6], 2048
    $region53: #{tpu_custom_call.1} parent=1 // pred_fallthru
      _
    // Predicated region
    $region54: #{tpu_custom_call.1} parent=1 // pred_check
      _
    $region55: #{tpu_custom_call.1} parent=1 // pred_check_branch
      %118 = sbr.rel (0) target = $region57
    $region56: #{tpu_custom_call.1} parent=1 // pred_region
      %119 = dma.done [#allocation6], 32
    $region57: #{tpu_custom_call.1} parent=1 // pred_fallthru
      _
    // Predicated region
    $region58: #{tpu_custom_call.1} parent=1 // pred_check
      _
    $region59: #{tpu_custom_call.1} parent=1 // pred_check_branch
      %121 = sbr.rel (0) target = $region61
    $region60: #{tpu_custom_call.1} parent=1 // pred_region
      %122 = dma.done [#allocation9], 8192
    $region61: #{tpu_custom_call.1} parent=1 // pred_fallthru
      _
    // Predicated region
    $region62: #{tpu_custom_call.1} parent=1 // pred_check
      _
    $region63: #{tpu_custom_call.1} parent=1 // pred_check_branch
      %124 = sbr.rel (0) target = $region65
    $region64: #{tpu_custom_call.1} parent=1 // pred_region
      %125 = dma.done [#allocation9], 16384
    $region65: #{tpu_custom_call.1} parent=1 // pred_fallthru
      _
    // Predicated region
    $region66: #{tpu_custom_call.1} parent=1 // pred_check
      _
    $region67: #{tpu_custom_call.1} parent=1 // pred_check_branch
      %127 = sbr.rel (0) target = $region69
    $region68: #{tpu_custom_call.1} parent=1 // pred_region
      %128 = dma.done [#allocation12], 8192
    $region69: #{tpu_custom_call.1} parent=1 // pred_fallthru
      _
    // Predicated region
    $region70: #{tpu_custom_call.1} parent=1 // pred_check
      _
    $region71: #{tpu_custom_call.1} parent=1 // pred_check_branch
      %130 = sbr.rel (0) target = $region73
    $region72: #{tpu_custom_call.1} parent=1 // pred_region
      %131 = dma.done [#allocation12], 2048
    $region73: #{tpu_custom_call.1} parent=1 // pred_fallthru
      _
    %v133 = vld [vmem:[#allocation2] sm:$0xff]
    %v134 = vld [vmem:[#allocation2 + $0x8] sm:$0xff]
    %v135 = vpack.c.bf16 %v134, %v133
    %v136 = vld [vmem:[#allocation5] sm:$0xff]
    %v137 = vld [vmem:[#allocation5 + $0x8] sm:$0xff]
    %v138 = vld [vmem:[#allocation5 + $0x10] sm:$0xff]
    %v139 = vld [vmem:[#allocation5 + $0x18] sm:$0xff]
    %v140 = vld [vmem:[#allocation5 + $0x20] sm:$0xff]
    %v141 = vld [vmem:[#allocation5 + $0x28] sm:$0xff]
    %v142 = vld [vmem:[#allocation5 + $0x30] sm:$0xff]
    %v143 = vld [vmem:[#allocation5 + $0x38] sm:$0xff]
    %v144 = vld [vmem:[#allocation5 + $0x40] sm:$0xff]
    %v145 = vld [vmem:[#allocation5 + $0x48] sm:$0xff]
    %v146 = vld [vmem:[#allocation5 + $0x50] sm:$0xff]
    %v147 = vld [vmem:[#allocation5 + $0x58] sm:$0xff]
    %v148 = vld [vmem:[#allocation5 + $0x60] sm:$0xff]
    %v149 = vld [vmem:[#allocation5 + $0x68] sm:$0xff]
    %v150 = vld [vmem:[#allocation5 + $0x70] sm:$0xff]
    %v151 = vld [vmem:[#allocation5 + $0x78] sm:$0xff]
    %v152 = vld [vmem:[#allocation7] sm:$0x3]
    %v154 = vlaneseq
    %v155 = vshrl.u32 %v154, 7
    %v156 = vsub.s32 0, %v155
    %v157 = vrot.slane %v152, %v156
    %v158 = vlaneseq
    %v159 = vshrl.u32 %v158, 7
    %v160 = vsub.s32 1, %v159
    %v161 = vrot.slane %v152, %v160
    %v180 = vunpack.c.l.b16 %v136
    %v181 = vunpack.c.h.b16 %v136
    %v182 = vunpack.c.l.b16 %v137
    %v183 = vunpack.c.h.b16 %v137
    %v184 = vunpack.c.l.b16 %v138
    %v185 = vunpack.c.h.b16 %v138
    %v186 = vunpack.c.l.b16 %v139
    %v187 = vunpack.c.h.b16 %v139
    %v188 = vunpack.c.l.b16 %v140
    %v189 = vunpack.c.h.b16 %v140
    %v190 = vunpack.c.l.b16 %v141
    %v191 = vunpack.c.h.b16 %v141
    %v192 = vunpack.c.l.b16 %v142
    %v193 = vunpack.c.h.b16 %v142
    %v194 = vunpack.c.l.b16 %v143
    %v195 = vunpack.c.h.b16 %v143
    %v196 = vunpack.c.l.b16 %v144
    %v197 = vunpack.c.h.b16 %v144
    %v198 = vunpack.c.l.b16 %v145
    %v199 = vunpack.c.h.b16 %v145
    %v200 = vunpack.c.l.b16 %v146
    %v201 = vunpack.c.h.b16 %v146
    %v202 = vunpack.c.l.b16 %v147
    %v203 = vunpack.c.h.b16 %v147
    %v204 = vunpack.c.l.b16 %v148
    %v205 = vunpack.c.h.b16 %v148
    %v206 = vunpack.c.l.b16 %v149
    %v207 = vunpack.c.h.b16 %v149
    %v208 = vunpack.c.l.b16 %v150
    %v209 = vunpack.c.h.b16 %v150
    %v210 = vunpack.c.l.b16 %v151
    %v211 = vunpack.c.h.b16 %v151
    %v212 = vpack.c.b16 %v182, %v180
    %v213 = vpack.c.b16 %v183, %v181
    %v214 = vpack.c.b16 %v186, %v184
    %v215 = vpack.c.b16 %v187, %v185
    %v216 = vpack.c.b16 %v190, %v188
    %v217 = vpack.c.b16 %v191, %v189
    %v218 = vpack.c.b16 %v194, %v192
    %v219 = vpack.c.b16 %v195, %v193
    %v220 = vpack.c.b16 %v198, %v196
    %v221 = vpack.c.b16 %v199, %v197
    %v222 = vpack.c.b16 %v202, %v200
    %v223 = vpack.c.b16 %v203, %v201
    %v224 = vpack.c.b16 %v206, %v204
    %v225 = vpack.c.b16 %v207, %v205
    %v226 = vpack.c.b16 %v210, %v208
    %v227 = vpack.c.b16 %v211, %v209
    %244 = vmatprep.subr.bf16.mxu0 %v227
    %245 = vmatpush1.bf16.msra.mxu0 %v226
    %246 = vmatprep.subr.bf16.mxu0 %v225
    %247 = vmatpush1.bf16.msra.mxu0 %v224
    %248 = vmatprep.subr.bf16.mxu0 %v223
    %249 = vmatpush1.bf16.msra.mxu0 %v222
    %250 = vmatprep.subr.bf16.mxu0 %v221
    %251 = vmatpush1.bf16.msra.mxu0 %v220
    %252 = vmatprep.subr.bf16.mxu0 %v219
    %253 = vmatpush1.bf16.msra.mxu0 %v218
    %254 = vmatprep.subr.bf16.mxu0 %v217
    %255 = vmatpush1.bf16.msra.mxu0 %v216
    %256 = vmatprep.subr.bf16.mxu0 %v215
    %257 = vmatpush1.bf16.msra.mxu0 %v214
    %258 = vmatprep.subr.bf16.mxu0 %v213
    %259 = vmatpush1.bf16.msra.mxu0 %v212
    %260 = vmatprep.subr.bf16.mxu0 0
    %261 = vmatpush2.bf16.msra.mxu0 0
    %262 = vmatprep.subr.bf16.mxu0 0
    %263 = vmatpush2.bf16.msra.mxu0 0
    %264 = vmatprep.subr.bf16.mxu0 0
    %265 = vmatpush2.bf16.msra.mxu0 0
    %266 = vmatprep.subr.bf16.mxu0 0
    %267 = vmatpush2.bf16.msra.mxu0 0
    %268 = vmatprep.subr.bf16.mxu0 0
    %269 = vmatpush2.bf16.msra.mxu0 0
    %270 = vmatprep.subr.bf16.mxu0 0
    %271 = vmatpush2.bf16.msra.mxu0 0
    %272 = vmatprep.subr.bf16.mxu0 0
    %273 = vmatpush2.bf16.msra.mxu0 0
    %274 = vmatprep.subr.bf16.mxu0 0
    %275 = vmatpush2.bf16.msra.mxu0 0
    %276 = vmatprep.mubr.bf16.mxu0 0
    %277 = vmatmul.mubr.bf16.gmra.mxu0 %v135
    %v278 = vpop.f32.mrf.mxu0
    %v279 = vadd.f32 %v157, %v278
    %v280 = vpop.f32.mrf.mxu0
    %v281 = vadd.f32 %v161, %v280
    %v282 = vpop.f32.mrf.mxu0
    %v283 = vadd.f32 %v157, %v282
    %v284 = vpop.f32.mrf.mxu0
    %v285 = vadd.f32 %v161, %v284
    %286 = vdwg.mxu0
    %v287 = vmax.f32 %v279, 0.0
    %v288 = vmax.f32 %v281, 0.0
    %v289 = vmax.f32 %v283, 0.0
    %v290 = vmax.f32 %v285, 0.0
    %v291 = vpack.c.bf16 %v289, %v287
    %v292 = vpack.c.bf16 %v290, %v288
    %v293 = vld [vmem:[#allocation8] sm:$0xff]
    %v294 = vld [vmem:[#allocation8 + $0x8] sm:$0xff]
    %v295 = vld [vmem:[#allocation8 + $0x10] sm:$0xff]
    %v296 = vld [vmem:[#allocation8 + $0x18] sm:$0xff]
    %v297 = vld [vmem:[#allocation8 + $0x20] sm:$0xff]
    %v298 = vld [vmem:[#allocation8 + $0x28] sm:$0xff]
    %v299 = vld [vmem:[#allocation8 + $0x30] sm:$0xff]
    %v300 = vld [vmem:[#allocation8 + $0x38] sm:$0xff]
    %v301 = vld [vmem:[#allocation8 + $0x40] sm:$0xff]
    %v302 = vld [vmem:[#allocation8 + $0x48] sm:$0xff]
    %v303 = vld [vmem:[#allocation8 + $0x50] sm:$0xff]
    %v304 = vld [vmem:[#allocation8 + $0x58] sm:$0xff]
    %v305 = vld [vmem:[#allocation8 + $0x60] sm:$0xff]
    %v306 = vld [vmem:[#allocation8 + $0x68] sm:$0xff]
    %v307 = vld [vmem:[#allocation8 + $0x70] sm:$0xff]
    %v308 = vld [vmem:[#allocation8 + $0x78] sm:$0xff]
    %v309 = vld [vmem:[#allocation8 + $0x80] sm:$0xff]
    %v310 = vld [vmem:[#allocation8 + $0x88] sm:$0xff]
    %v311 = vld [vmem:[#allocation8 + $0x90] sm:$0xff]
    %v312 = vld [vmem:[#allocation8 + $0x98] sm:$0xff]
    %v313 = vld [vmem:[#allocation8 + $0xa0] sm:$0xff]
    %v314 = vld [vmem:[#allocation8 + $0xa8] sm:$0xff]
    %v315 = vld [vmem:[#allocation8 + $0xb0] sm:$0xff]
    %v316 = vld [vmem:[#allocation8 + $0xb8] sm:$0xff]
    %v317 = vld [vmem:[#allocation8 + $0xc0] sm:$0xff]
    %v318 = vld [vmem:[#allocation8 + $0xc8] sm:$0xff]
    %v319 = vld [vmem:[#allocation8 + $0xd0] sm:$0xff]
    %v320 = vld [vmem:[#allocation8 + $0xd8] sm:$0xff]
    %v321 = vld [vmem:[#allocation8 + $0xe0] sm:$0xff]
    %v322 = vld [vmem:[#allocation8 + $0xe8] sm:$0xff]
    %v323 = vld [vmem:[#allocation8 + $0xf0] sm:$0xff]
    %v324 = vld [vmem:[#allocation8 + $0xf8] sm:$0xff]
    %v325 = vld [vmem:[#allocation8 + $0x100] sm:$0xff]
    %v326 = vld [vmem:[#allocation8 + $0x108] sm:$0xff]
    %v327 = vld [vmem:[#allocation8 + $0x110] sm:$0xff]
    %v328 = vld [vmem:[#allocation8 + $0x118] sm:$0xff]
    %v329 = vld [vmem:[#allocation8 + $0x120] sm:$0xff]
    %v330 = vld [vmem:[#allocation8 + $0x128] sm:$0xff]
    %v331 = vld [vmem:[#allocation8 + $0x130] sm:$0xff]
    %v332 = vld [vmem:[#allocation8 + $0x138] sm:$0xff]
    %v333 = vld [vmem:[#allocation8 + $0x140] sm:$0xff]
    %v334 = vld [vmem:[#allocation8 + $0x148] sm:$0xff]
    %v335 = vld [vmem:[#allocation8 + $0x150] sm:$0xff]
    %v336 = vld [vmem:[#allocation8 + $0x158] sm:$0xff]
    %v337 = vld [vmem:[#allocation8 + $0x160] sm:$0xff]
    %v338 = vld [vmem:[#allocation8 + $0x168] sm:$0xff]
    %v339 = vld [vmem:[#allocation8 + $0x170] sm:$0xff]
    %v340 = vld [vmem:[#allocation8 + $0x178] sm:$0xff]
    %v341 = vld [vmem:[#allocation8 + $0x180] sm:$0xff]
    %v342 = vld [vmem:[#allocation8 + $0x188] sm:$0xff]
    %v343 = vld [vmem:[#allocation8 + $0x190] sm:$0xff]
    %v344 = vld [vmem:[#allocation8 + $0x198] sm:$0xff]
    %v345 = vld [vmem:[#allocation8 + $0x1a0] sm:$0xff]
    %v346 = vld [vmem:[#allocation8 + $0x1a8] sm:$0xff]
    %v347 = vld [vmem:[#allocation8 + $0x1b0] sm:$0xff]
    %v348 = vld [vmem:[#allocation8 + $0x1b8] sm:$0xff]
    %v349 = vld [vmem:[#allocation8 + $0x1c0] sm:$0xff]
    %v350 = vld [vmem:[#allocation8 + $0x1c8] sm:$0xff]
    %v351 = vld [vmem:[#allocation8 + $0x1d0] sm:$0xff]
    %v352 = vld [vmem:[#allocation8 + $0x1d8] sm:$0xff]
    %v353 = vld [vmem:[#allocation8 + $0x1e0] sm:$0xff]
    %v354 = vld [vmem:[#allocation8 + $0x1e8] sm:$0xff]
    %v355 = vld [vmem:[#allocation8 + $0x1f0] sm:$0xff]
    %v356 = vld [vmem:[#allocation8 + $0x1f8] sm:$0xff]
    %v357 = vld [vmem:[%s4] sm:$0xf]
    %v359 = vlaneseq
    %v360 = vshrl.u32 %v359, 7
    %v361 = vsub.s32 0, %v360
    %v362 = vrot.slane %v357, %v361
    %v363 = vlaneseq
    %v364 = vshrl.u32 %v363, 7
    %v365 = vsub.s32 1, %v364
    %v366 = vrot.slane %v357, %v365
    %v367 = vlaneseq
    %v368 = vshrl.u32 %v367, 7
    %v369 = vsub.s32 2, %v368
    %v370 = vrot.slane %v357, %v369
    %v371 = vlaneseq
    %v372 = vshrl.u32 %v371, 7
    %v373 = vsub.s32 3, %v372
    %v374 = vrot.slane %v357, %v373
    %v443 = vunpack.c.l.b16 %v293
    %v444 = vunpack.c.h.b16 %v293
    %v445 = vunpack.c.l.b16 %v294
    %v446 = vunpack.c.h.b16 %v294
    %v447 = vunpack.c.l.b16 %v295
    %v448 = vunpack.c.h.b16 %v295
    %v449 = vunpack.c.l.b16 %v296
    %v450 = vunpack.c.h.b16 %v296
    %v451 = vunpack.c.l.b16 %v297
    %v452 = vunpack.c.h.b16 %v297
    %v453 = vunpack.c.l.b16 %v298
    %v454 = vunpack.c.h.b16 %v298
    %v455 = vunpack.c.l.b16 %v299
    %v456 = vunpack.c.h.b16 %v299
    %v457 = vunpack.c.l.b16 %v300
    %v458 = vunpack.c.h.b16 %v300
    %v459 = vunpack.c.l.b16 %v301
    %v460 = vunpack.c.h.b16 %v301
    %v461 = vunpack.c.l.b16 %v302
    %v462 = vunpack.c.h.b16 %v302
    %v463 = vunpack.c.l.b16 %v303
    %v464 = vunpack.c.h.b16 %v303
    %v465 = vunpack.c.l.b16 %v304
    %v466 = vunpack.c.h.b16 %v304
    %v467 = vunpack.c.l.b16 %v305
    %v468 = vunpack.c.h.b16 %v305
    %v469 = vunpack.c.l.b16 %v306
    %v470 = vunpack.c.h.b16 %v306
    %v471 = vunpack.c.l.b16 %v307
    %v472 = vunpack.c.h.b16 %v307
    %v473 = vunpack.c.l.b16 %v308
    %v474 = vunpack.c.h.b16 %v308
    %v475 = vunpack.c.l.b16 %v309
    %v476 = vunpack.c.h.b16 %v309
    %v477 = vunpack.c.l.b16 %v310
    %v478 = vunpack.c.h.b16 %v310
    %v479 = vunpack.c.l.b16 %v311
    %v480 = vunpack.c.h.b16 %v311
    %v481 = vunpack.c.l.b16 %v312
    %v482 = vunpack.c.h.b16 %v312
    %v483 = vunpack.c.l.b16 %v313
    %v484 = vunpack.c.h.b16 %v313
    %v485 = vunpack.c.l.b16 %v314
    %v486 = vunpack.c.h.b16 %v314
    %v487 = vunpack.c.l.b16 %v315
    %v488 = vunpack.c.h.b16 %v315
    %v489 = vunpack.c.l.b16 %v316
    %v490 = vunpack.c.h.b16 %v316
    %v491 = vunpack.c.l.b16 %v317
    %v492 = vunpack.c.h.b16 %v317
    %v493 = vunpack.c.l.b16 %v318
    %v494 = vunpack.c.h.b16 %v318
    %v495 = vunpack.c.l.b16 %v319
    %v496 = vunpack.c.h.b16 %v319
    %v497 = vunpack.c.l.b16 %v320
    %v498 = vunpack.c.h.b16 %v320
    %v499 = vunpack.c.l.b16 %v321
    %v500 = vunpack.c.h.b16 %v321
    %v501 = vunpack.c.l.b16 %v322
    %v502 = vunpack.c.h.b16 %v322
    %v503 = vunpack.c.l.b16 %v323
    %v504 = vunpack.c.h.b16 %v323
    %v505 = vunpack.c.l.b16 %v324
    %v506 = vunpack.c.h.b16 %v324
    %v507 = vunpack.c.l.b16 %v325
    %v508 = vunpack.c.h.b16 %v325
    %v509 = vunpack.c.l.b16 %v326
    %v510 = vunpack.c.h.b16 %v326
    %v511 = vunpack.c.l.b16 %v327
    %v512 = vunpack.c.h.b16 %v327
    %v513 = vunpack.c.l.b16 %v328
    %v514 = vunpack.c.h.b16 %v328
    %v515 = vunpack.c.l.b16 %v329
    %v516 = vunpack.c.h.b16 %v329
    %v517 = vunpack.c.l.b16 %v330
    %v518 = vunpack.c.h.b16 %v330
    %v519 = vunpack.c.l.b16 %v331
    %v520 = vunpack.c.h.b16 %v331
    %v521 = vunpack.c.l.b16 %v332
    %v522 = vunpack.c.h.b16 %v332
    %v523 = vunpack.c.l.b16 %v333
    %v524 = vunpack.c.h.b16 %v333
    %v525 = vunpack.c.l.b16 %v334
    %v526 = vunpack.c.h.b16 %v334
    %v527 = vunpack.c.l.b16 %v335
    %v528 = vunpack.c.h.b16 %v335
    %v529 = vunpack.c.l.b16 %v336
    %v530 = vunpack.c.h.b16 %v336
    %v531 = vunpack.c.l.b16 %v337
    %v532 = vunpack.c.h.b16 %v337
    %v533 = vunpack.c.l.b16 %v338
    %v534 = vunpack.c.h.b16 %v338
    %v535 = vunpack.c.l.b16 %v339
    %v536 = vunpack.c.h.b16 %v339
    %v537 = vunpack.c.l.b16 %v340
    %v538 = vunpack.c.h.b16 %v340
    %v539 = vunpack.c.l.b16 %v341
    %v540 = vunpack.c.h.b16 %v341
    %v541 = vunpack.c.l.b16 %v342
    %v542 = vunpack.c.h.b16 %v342
    %v543 = vunpack.c.l.b16 %v343
    %v544 = vunpack.c.h.b16 %v343
    %v545 = vunpack.c.l.b16 %v344
    %v546 = vunpack.c.h.b16 %v344
    %v547 = vunpack.c.l.b16 %v345
    %v548 = vunpack.c.h.b16 %v345
    %v549 = vunpack.c.l.b16 %v346
    %v550 = vunpack.c.h.b16 %v346
    %v551 = vunpack.c.l.b16 %v347
    %v552 = vunpack.c.h.b16 %v347
    %v553 = vunpack.c.l.b16 %v348
    %v554 = vunpack.c.h.b16 %v348
    %v555 = vunpack.c.l.b16 %v349
    %v556 = vunpack.c.h.b16 %v349
    %v557 = vunpack.c.l.b16 %v350
    %v558 = vunpack.c.h.b16 %v350
    %v559 = vunpack.c.l.b16 %v351
    %v560 = vunpack.c.h.b16 %v351
    %v561 = vunpack.c.l.b16 %v352
    %v562 = vunpack.c.h.b16 %v352
    %v563 = vunpack.c.l.b16 %v353
    %v564 = vunpack.c.h.b16 %v353
    %v565 = vunpack.c.l.b16 %v354
    %v566 = vunpack.c.h.b16 %v354
    %v567 = vunpack.c.l.b16 %v355
    %v568 = vunpack.c.h.b16 %v355
    %v569 = vunpack.c.l.b16 %v356
    %v570 = vunpack.c.h.b16 %v356
    %v571 = vpack.c.b16 %v447, %v443
    %v572 = vpack.c.b16 %v448, %v444
    %v573 = vpack.c.b16 %v449, %v445
    %v574 = vpack.c.b16 %v450, %v446
    %v575 = vpack.c.b16 %v455, %v451
    %v576 = vpack.c.b16 %v456, %v452
    %v577 = vpack.c.b16 %v457, %v453
    %v578 = vpack.c.b16 %v458, %v454
    %v579 = vpack.c.b16 %v463, %v459
    %v580 = vpack.c.b16 %v464, %v460
    %v581 = vpack.c.b16 %v465, %v461
    %v582 = vpack.c.b16 %v466, %v462
    %v583 = vpack.c.b16 %v471, %v467
    %v584 = vpack.c.b16 %v472, %v468
    %v585 = vpack.c.b16 %v473, %v469
    %v586 = vpack.c.b16 %v474, %v470
    %v587 = vpack.c.b16 %v479, %v475
    %v588 = vpack.c.b16 %v480, %v476
    %v589 = vpack.c.b16 %v481, %v477
    %v590 = vpack.c.b16 %v482, %v478
    %v591 = vpack.c.b16 %v487, %v483
    %v592 = vpack.c.b16 %v488, %v484
    %v593 = vpack.c.b16 %v489, %v485
    %v594 = vpack.c.b16 %v490, %v486
    %v595 = vpack.c.b16 %v495, %v491
    %v596 = vpack.c.b16 %v496, %v492
    %v597 = vpack.c.b16 %v497, %v493
    %v598 = vpack.c.b16 %v498, %v494
    %v599 = vpack.c.b16 %v503, %v499
    %v600 = vpack.c.b16 %v504, %v500
    %v601 = vpack.c.b16 %v505, %v501
    %v602 = vpack.c.b16 %v506, %v502
    %v603 = vpack.c.b16 %v511, %v507
    %v604 = vpack.c.b16 %v512, %v508
    %v605 = vpack.c.b16 %v513, %v509
    %v606 = vpack.c.b16 %v514, %v510
    %v607 = vpack.c.b16 %v519, %v515
    %v608 = vpack.c.b16 %v520, %v516
    %v609 = vpack.c.b16 %v521, %v517
    %v610 = vpack.c.b16 %v522, %v518
    %v611 = vpack.c.b16 %v527, %v523
    %v612 = vpack.c.b16 %v528, %v524
    %v613 = vpack.c.b16 %v529, %v525
    %v614 = vpack.c.b16 %v530, %v526
    %v615 = vpack.c.b16 %v535, %v531
    %v616 = vpack.c.b16 %v536, %v532
    %v617 = vpack.c.b16 %v537, %v533
    %v618 = vpack.c.b16 %v538, %v534
    %v619 = vpack.c.b16 %v543, %v539
    %v620 = vpack.c.b16 %v544, %v540
    %v621 = vpack.c.b16 %v545, %v541
    %v622 = vpack.c.b16 %v546, %v542
    %v623 = vpack.c.b16 %v551, %v547
    %v624 = vpack.c.b16 %v552, %v548
    %v625 = vpack.c.b16 %v553, %v549
    %v626 = vpack.c.b16 %v554, %v550
    %v627 = vpack.c.b16 %v559, %v555
    %v628 = vpack.c.b16 %v560, %v556
    %v629 = vpack.c.b16 %v561, %v557
    %v630 = vpack.c.b16 %v562, %v558
    %v631 = vpack.c.b16 %v567, %v563
    %v632 = vpack.c.b16 %v568, %v564
    %v633 = vpack.c.b16 %v569, %v565
    %v634 = vpack.c.b16 %v570, %v566
    %699 = vmatprep.subr.bf16.mxu0 %v600
    %700 = vmatpush1.bf16.msra.mxu0 %v599
    %701 = vmatprep.subr.bf16.mxu0 %v596
    %702 = vmatpush1.bf16.msra.mxu0 %v595
    %703 = vmatprep.subr.bf16.mxu0 %v592
    %704 = vmatpush1.bf16.msra.mxu0 %v591
    %705 = vmatprep.subr.bf16.mxu0 %v588
    %706 = vmatpush1.bf16.msra.mxu0 %v587
    %707 = vmatprep.subr.bf16.mxu0 %v584
    %708 = vmatpush1.bf16.msra.mxu0 %v583
    %709 = vmatprep.subr.bf16.mxu0 %v580
    %710 = vmatpush1.bf16.msra.mxu0 %v579
    %711 = vmatprep.subr.bf16.mxu0 %v576
    %712 = vmatpush1.bf16.msra.mxu0 %v575
    %713 = vmatprep.subr.bf16.mxu0 %v572
    %714 = vmatpush1.bf16.msra.mxu0 %v571
    %715 = vmatprep.subr.bf16.mxu0 %v632
    %716 = vmatpush2.bf16.msra.mxu0 %v631
    %717 = vmatprep.subr.bf16.mxu0 %v628
    %718 = vmatpush2.bf16.msra.mxu0 %v627
    %719 = vmatprep.subr.bf16.mxu0 %v624
    %720 = vmatpush2.bf16.msra.mxu0 %v623
    %721 = vmatprep.subr.bf16.mxu0 %v620
    %722 = vmatpush2.bf16.msra.mxu0 %v619
    %723 = vmatprep.subr.bf16.mxu0 %v616
    %724 = vmatpush2.bf16.msra.mxu0 %v615
    %725 = vmatprep.subr.bf16.mxu0 %v612
    %726 = vmatpush2.bf16.msra.mxu0 %v611
    %727 = vmatprep.subr.bf16.mxu0 %v608
    %728 = vmatpush2.bf16.msra.mxu0 %v607
    %729 = vmatprep.subr.bf16.mxu0 %v604
    %730 = vmatpush2.bf16.msra.mxu0 %v603
    %731 = vmatprep.mubr.bf16.mxu0 %v292
    %732 = vmatmul.mubr.bf16.gmra.mxu0 %v291
    %v733 = vpop.f32.mrf.mxu0
    %v734 = vadd.f32 %v362, %v733
    %v735 = vpop.f32.mrf.mxu0
    %v736 = vadd.f32 %v366, %v735
    %v737 = vpop.f32.mrf.mxu0
    %v738 = vadd.f32 %v362, %v737
    %v739 = vpop.f32.mrf.mxu0
    %v740 = vadd.f32 %v366, %v739
    %741 = vdwg.mxu0
    %742 = vmatprep.subr.bf16.mxu0 %v602
    %743 = vmatpush1.bf16.msra.mxu0 %v601
    %744 = vmatprep.subr.bf16.mxu0 %v598
    %745 = vmatpush1.bf16.msra.mxu0 %v597
    %746 = vmatprep.subr.bf16.mxu0 %v594
    %747 = vmatpush1.bf16.msra.mxu0 %v593
    %748 = vmatprep.subr.bf16.mxu0 %v590
    %749 = vmatpush1.bf16.msra.mxu0 %v589
    %750 = vmatprep.subr.bf16.mxu0 %v586
    %751 = vmatpush1.bf16.msra.mxu0 %v585
    %752 = vmatprep.subr.bf16.mxu0 %v582
    %753 = vmatpush1.bf16.msra.mxu0 %v581
    %754 = vmatprep.subr.bf16.mxu0 %v578
    %755 = vmatpush1.bf16.msra.mxu0 %v577
    %756 = vmatprep.subr.bf16.mxu0 %v574
    %757 = vmatpush1.bf16.msra.mxu0 %v573
    %758 = vmatprep.subr.bf16.mxu0 %v634
    %759 = vmatpush2.bf16.msra.mxu0 %v633
    %760 = vmatprep.subr.bf16.mxu0 %v630
    %761 = vmatpush2.bf16.msra.mxu0 %v629
    %762 = vmatprep.subr.bf16.mxu0 %v626
    %763 = vmatpush2.bf16.msra.mxu0 %v625
    %764 = vmatprep.subr.bf16.mxu0 %v622
    %765 = vmatpush2.bf16.msra.mxu0 %v621
    %766 = vmatprep.subr.bf16.mxu0 %v618
    %767 = vmatpush2.bf16.msra.mxu0 %v617
    %768 = vmatprep.subr.bf16.mxu0 %v614
    %769 = vmatpush2.bf16.msra.mxu0 %v613
    %770 = vmatprep.subr.bf16.mxu0 %v610
    %771 = vmatpush2.bf16.msra.mxu0 %v609
    %772 = vmatprep.subr.bf16.mxu0 %v606
    %773 = vmatpush2.bf16.msra.mxu0 %v605
    %774 = vmatprep.mubr.bf16.mxu0 %v292
    %775 = vmatmul.mubr.bf16.gmra.mxu0 %v291
    %v776 = vpop.f32.mrf.mxu0
    %v777 = vadd.f32 %v370, %v776
    %v778 = vpop.f32.mrf.mxu0
    %v779 = vadd.f32 %v374, %v778
    %v780 = vpop.f32.mrf.mxu0
    %v781 = vadd.f32 %v370, %v780
    %v782 = vpop.f32.mrf.mxu0
    %v783 = vadd.f32 %v374, %v782
    %784 = vdwg.mxu0
    %v785 = vmax.f32 %v734, 0.0
    %v786 = vmax.f32 %v736, 0.0
    %v787 = vmax.f32 %v777, 0.0
    %v788 = vmax.f32 %v779, 0.0
    %v789 = vmax.f32 %v738, 0.0
    %v790 = vmax.f32 %v740, 0.0
    %v791 = vmax.f32 %v781, 0.0
    %v792 = vmax.f32 %v783, 0.0
    %v793 = vpack.c.bf16 %v789, %v785
    %v794 = vpack.c.bf16 %v790, %v786
    %v795 = vpack.c.bf16 %v791, %v787
    %v796 = vpack.c.bf16 %v792, %v788
    %v797 = vld [vmem:[#allocation10] sm:$0xff]
    %v798 = vld [vmem:[#allocation10 + $0x8] sm:$0xff]
    %v799 = vld [vmem:[#allocation10 + $0x10] sm:$0xff]
    %v800 = vld [vmem:[#allocation10 + $0x18] sm:$0xff]
    %v801 = vld [vmem:[#allocation10 + $0x20] sm:$0xff]
    %v802 = vld [vmem:[#allocation10 + $0x28] sm:$0xff]
    %v803 = vld [vmem:[#allocation10 + $0x30] sm:$0xff]
    %v804 = vld [vmem:[#allocation10 + $0x38] sm:$0xff]
    %v805 = vld [vmem:[#allocation10 + $0x40] sm:$0xff]
    %v806 = vld [vmem:[#allocation10 + $0x48] sm:$0xff]
    %v807 = vld [vmem:[#allocation10 + $0x50] sm:$0xff]
    %v808 = vld [vmem:[#allocation10 + $0x58] sm:$0xff]
    %v809 = vld [vmem:[#allocation10 + $0x60] sm:$0xff]
    %v810 = vld [vmem:[#allocation10 + $0x68] sm:$0xff]
    %v811 = vld [vmem:[#allocation10 + $0x70] sm:$0xff]
    %v812 = vld [vmem:[#allocation10 + $0x78] sm:$0xff]
    %v813 = vld [vmem:[#allocation10 + $0x80] sm:$0xff]
    %v814 = vld [vmem:[#allocation10 + $0x88] sm:$0xff]
    %v815 = vld [vmem:[#allocation10 + $0x90] sm:$0xff]
    %v816 = vld [vmem:[#allocation10 + $0x98] sm:$0xff]
    %v817 = vld [vmem:[#allocation10 + $0xa0] sm:$0xff]
    %v818 = vld [vmem:[#allocation10 + $0xa8] sm:$0xff]
    %v819 = vld [vmem:[#allocation10 + $0xb0] sm:$0xff]
    %v820 = vld [vmem:[#allocation10 + $0xb8] sm:$0xff]
    %v821 = vld [vmem:[#allocation10 + $0xc0] sm:$0xff]
    %v822 = vld [vmem:[#allocation10 + $0xc8] sm:$0xff]
    %v823 = vld [vmem:[#allocation10 + $0xd0] sm:$0xff]
    %v824 = vld [vmem:[#allocation10 + $0xd8] sm:$0xff]
    %v825 = vld [vmem:[#allocation10 + $0xe0] sm:$0xff]
    %v826 = vld [vmem:[#allocation10 + $0xe8] sm:$0xff]
    %v827 = vld [vmem:[#allocation10 + $0xf0] sm:$0xff]
    %v828 = vld [vmem:[#allocation10 + $0xf8] sm:$0xff]
    %v829 = vld [vmem:[#allocation10 + $0x100] sm:$0xff]
    %v830 = vld [vmem:[#allocation10 + $0x108] sm:$0xff]
    %v831 = vld [vmem:[#allocation10 + $0x110] sm:$0xff]
    %v832 = vld [vmem:[#allocation10 + $0x118] sm:$0xff]
    %v833 = vld [vmem:[#allocation10 + $0x120] sm:$0xff]
    %v834 = vld [vmem:[#allocation10 + $0x128] sm:$0xff]
    %v835 = vld [vmem:[#allocation10 + $0x130] sm:$0xff]
    %v836 = vld [vmem:[#allocation10 + $0x138] sm:$0xff]
    %v837 = vld [vmem:[#allocation10 + $0x140] sm:$0xff]
    %v838 = vld [vmem:[#allocation10 + $0x148] sm:$0xff]
    %v839 = vld [vmem:[#allocation10 + $0x150] sm:$0xff]
    %v840 = vld [vmem:[#allocation10 + $0x158] sm:$0xff]
    %v841 = vld [vmem:[#allocation10 + $0x160] sm:$0xff]
    %v842 = vld [vmem:[#allocation10 + $0x168] sm:$0xff]
    %v843 = vld [vmem:[#allocation10 + $0x170] sm:$0xff]
    %v844 = vld [vmem:[#allocation10 + $0x178] sm:$0xff]
    %v845 = vld [vmem:[#allocation10 + $0x180] sm:$0xff]
    %v846 = vld [vmem:[#allocation10 + $0x188] sm:$0xff]
    %v847 = vld [vmem:[#allocation10 + $0x190] sm:$0xff]
    %v848 = vld [vmem:[#allocation10 + $0x198] sm:$0xff]
    %v849 = vld [vmem:[#allocation10 + $0x1a0] sm:$0xff]
    %v850 = vld [vmem:[#allocation10 + $0x1a8] sm:$0xff]
    %v851 = vld [vmem:[#allocation10 + $0x1b0] sm:$0xff]
    %v852 = vld [vmem:[#allocation10 + $0x1b8] sm:$0xff]
    %v853 = vld [vmem:[#allocation10 + $0x1c0] sm:$0xff]
    %v854 = vld [vmem:[#allocation10 + $0x1c8] sm:$0xff]
    %v855 = vld [vmem:[#allocation10 + $0x1d0] sm:$0xff]
    %v856 = vld [vmem:[#allocation10 + $0x1d8] sm:$0xff]
    %v857 = vld [vmem:[#allocation10 + $0x1e0] sm:$0xff]
    %v858 = vld [vmem:[#allocation10 + $0x1e8] sm:$0xff]
    %v859 = vld [vmem:[#allocation10 + $0x1f0] sm:$0xff]
    %v860 = vld [vmem:[#allocation10 + $0x1f8] sm:$0xff]
    %v861 = vld [vmem:[#allocation10 + $0x200] sm:$0xff]
    %v862 = vld [vmem:[#allocation10 + $0x208] sm:$0xff]
    %v863 = vld [vmem:[#allocation10 + $0x210] sm:$0xff]
    %v864 = vld [vmem:[#allocation10 + $0x218] sm:$0xff]
    %v865 = vld [vmem:[#allocation10 + $0x220] sm:$0xff]
    %v866 = vld [vmem:[#allocation10 + $0x228] sm:$0xff]
    %v867 = vld [vmem:[#allocation10 + $0x230] sm:$0xff]
    %v868 = vld [vmem:[#allocation10 + $0x238] sm:$0xff]
    %v869 = vld [vmem:[#allocation10 + $0x240] sm:$0xff]
    %v870 = vld [vmem:[#allocation10 + $0x248] sm:$0xff]
    %v871 = vld [vmem:[#allocation10 + $0x250] sm:$0xff]
    %v872 = vld [vmem:[#allocation10 + $0x258] sm:$0xff]
    %v873 = vld [vmem:[#allocation10 + $0x260] sm:$0xff]
    %v874 = vld [vmem:[#allocation10 + $0x268] sm:$0xff]
    %v875 = vld [vmem:[#allocation10 + $0x270] sm:$0xff]
    %v876 = vld [vmem:[#allocation10 + $0x278] sm:$0xff]
    %v877 = vld [vmem:[#allocation10 + $0x280] sm:$0xff]
    %v878 = vld [vmem:[#allocation10 + $0x288] sm:$0xff]
    %v879 = vld [vmem:[#allocation10 + $0x290] sm:$0xff]
    %v880 = vld [vmem:[#allocation10 + $0x298] sm:$0xff]
    %v881 = vld [vmem:[#allocation10 + $0x2a0] sm:$0xff]
    %v882 = vld [vmem:[#allocation10 + $0x2a8] sm:$0xff]
    %v883 = vld [vmem:[#allocation10 + $0x2b0] sm:$0xff]
    %v884 = vld [vmem:[#allocation10 + $0x2b8] sm:$0xff]
    %v885 = vld [vmem:[#allocation10 + $0x2c0] sm:$0xff]
    %v886 = vld [vmem:[#allocation10 + $0x2c8] sm:$0xff]
    %v887 = vld [vmem:[#allocation10 + $0x2d0] sm:$0xff]
    %v888 = vld [vmem:[#allocation10 + $0x2d8] sm:$0xff]
    %v889 = vld [vmem:[#allocation10 + $0x2e0] sm:$0xff]
    %v890 = vld [vmem:[#allocation10 + $0x2e8] sm:$0xff]
    %v891 = vld [vmem:[#allocation10 + $0x2f0] sm:$0xff]
    %v892 = vld [vmem:[#allocation10 + $0x2f8] sm:$0xff]
    %v893 = vld [vmem:[#allocation10 + $0x300] sm:$0xff]
    %v894 = vld [vmem:[#allocation10 + $0x308] sm:$0xff]
    %v895 = vld [vmem:[#allocation10 + $0x310] sm:$0xff]
    %v896 = vld [vmem:[#allocation10 + $0x318] sm:$0xff]
    %v897 = vld [vmem:[#allocation10 + $0x320] sm:$0xff]
    %v898 = vld [vmem:[#allocation10 + $0x328] sm:$0xff]
    %v899 = vld [vmem:[#allocation10 + $0x330] sm:$0xff]
    %v900 = vld [vmem:[#allocation10 + $0x338] sm:$0xff]
    %v901 = vld [vmem:[#allocation10 + $0x340] sm:$0xff]
    %v902 = vld [vmem:[#allocation10 + $0x348] sm:$0xff]
    %v903 = vld [vmem:[#allocation10 + $0x350] sm:$0xff]
    %v904 = vld [vmem:[#allocation10 + $0x358] sm:$0xff]
    %v905 = vld [vmem:[#allocation10 + $0x360] sm:$0xff]
    %v906 = vld [vmem:[#allocation10 + $0x368] sm:$0xff]
    %v907 = vld [vmem:[#allocation10 + $0x370] sm:$0xff]
    %v908 = vld [vmem:[#allocation10 + $0x378] sm:$0xff]
    %v909 = vld [vmem:[#allocation10 + $0x380] sm:$0xff]
    %v910 = vld [vmem:[#allocation10 + $0x388] sm:$0xff]
    %v911 = vld [vmem:[#allocation10 + $0x390] sm:$0xff]
    %v912 = vld [vmem:[#allocation10 + $0x398] sm:$0xff]
    %v913 = vld [vmem:[#allocation10 + $0x3a0] sm:$0xff]
    %v914 = vld [vmem:[#allocation10 + $0x3a8] sm:$0xff]
    %v915 = vld [vmem:[#allocation10 + $0x3b0] sm:$0xff]
    %v916 = vld [vmem:[#allocation10 + $0x3b8] sm:$0xff]
    %v917 = vld [vmem:[#allocation10 + $0x3c0] sm:$0xff]
    %v918 = vld [vmem:[#allocation10 + $0x3c8] sm:$0xff]
    %v919 = vld [vmem:[#allocation10 + $0x3d0] sm:$0xff]
    %v920 = vld [vmem:[#allocation10 + $0x3d8] sm:$0xff]
    %v921 = vld [vmem:[#allocation10 + $0x3e0] sm:$0xff]
    %v922 = vld [vmem:[#allocation10 + $0x3e8] sm:$0xff]
    %v923 = vld [vmem:[#allocation10 + $0x3f0] sm:$0xff]
    %v924 = vld [vmem:[#allocation10 + $0x3f8] sm:$0xff]
    %v925 = vld [vmem:[%s6] sm:$0xf]
    %v927 = vlaneseq
    %v928 = vshrl.u32 %v927, 7
    %v929 = vsub.s32 0, %v928
    %v930 = vrot.slane %v925, %v929
    %v931 = vlaneseq
    %v932 = vshrl.u32 %v931, 7
    %v933 = vsub.s32 1, %v932
    %v934 = vrot.slane %v925, %v933
    %v935 = vlaneseq
    %v936 = vshrl.u32 %v935, 7
    %v937 = vsub.s32 2, %v936
    %v938 = vrot.slane %v925, %v937
    %v939 = vlaneseq
    %v940 = vshrl.u32 %v939, 7
    %v941 = vsub.s32 3, %v940
    %v942 = vrot.slane %v925, %v941
    %v1075 = vunpack.c.l.b16 %v797
    %v1076 = vunpack.c.h.b16 %v797
    %v1077 = vunpack.c.l.b16 %v798
    %v1078 = vunpack.c.h.b16 %v798
    %v1079 = vunpack.c.l.b16 %v799
    %v1080 = vunpack.c.h.b16 %v799
    %v1081 = vunpack.c.l.b16 %v800
    %v1082 = vunpack.c.h.b16 %v800
    %v1083 = vunpack.c.l.b16 %v801
    %v1084 = vunpack.c.h.b16 %v801
    %v1085 = vunpack.c.l.b16 %v802
    %v1086 = vunpack.c.h.b16 %v802
    %v1087 = vunpack.c.l.b16 %v803
    %v1088 = vunpack.c.h.b16 %v803
    %v1089 = vunpack.c.l.b16 %v804
    %v1090 = vunpack.c.h.b16 %v804
    %v1091 = vunpack.c.l.b16 %v805
    %v1092 = vunpack.c.h.b16 %v805
    %v1093 = vunpack.c.l.b16 %v806
    %v1094 = vunpack.c.h.b16 %v806
    %v1095 = vunpack.c.l.b16 %v807
    %v1096 = vunpack.c.h.b16 %v807
    %v1097 = vunpack.c.l.b16 %v808
    %v1098 = vunpack.c.h.b16 %v808
    %v1099 = vunpack.c.l.b16 %v809
    %v1100 = vunpack.c.h.b16 %v809
    %v1101 = vunpack.c.l.b16 %v810
    %v1102 = vunpack.c.h.b16 %v810
    %v1103 = vunpack.c.l.b16 %v811
    %v1104 = vunpack.c.h.b16 %v811
    %v1105 = vunpack.c.l.b16 %v812
    %v1106 = vunpack.c.h.b16 %v812
    %v1107 = vunpack.c.l.b16 %v813
    %v1108 = vunpack.c.h.b16 %v813
    %v1109 = vunpack.c.l.b16 %v814
    %v1110 = vunpack.c.h.b16 %v814
    %v1111 = vunpack.c.l.b16 %v815
    %v1112 = vunpack.c.h.b16 %v815
    %v1113 = vunpack.c.l.b16 %v816
    %v1114 = vunpack.c.h.b16 %v816
    %v1115 = vunpack.c.l.b16 %v817
    %v1116 = vunpack.c.h.b16 %v817
    %v1117 = vunpack.c.l.b16 %v818
    %v1118 = vunpack.c.h.b16 %v818
    %v1119 = vunpack.c.l.b16 %v819
    %v1120 = vunpack.c.h.b16 %v819
    %v1121 = vunpack.c.l.b16 %v820
    %v1122 = vunpack.c.h.b16 %v820
    %v1123 = vunpack.c.l.b16 %v821
    %v1124 = vunpack.c.h.b16 %v821
    %v1125 = vunpack.c.l.b16 %v822
    %v1126 = vunpack.c.h.b16 %v822
    %v1127 = vunpack.c.l.b16 %v823
    %v1128 = vunpack.c.h.b16 %v823
    %v1129 = vunpack.c.l.b16 %v824
    %v1130 = vunpack.c.h.b16 %v824
    %v1131 = vunpack.c.l.b16 %v825
    %v1132 = vunpack.c.h.b16 %v825
    %v1133 = vunpack.c.l.b16 %v826
    %v1134 = vunpack.c.h.b16 %v826
    %v1135 = vunpack.c.l.b16 %v827
    %v1136 = vunpack.c.h.b16 %v827
    %v1137 = vunpack.c.l.b16 %v828
    %v1138 = vunpack.c.h.b16 %v828
    %v1139 = vunpack.c.l.b16 %v829
    %v1140 = vunpack.c.h.b16 %v829
    %v1141 = vunpack.c.l.b16 %v830
    %v1142 = vunpack.c.h.b16 %v830
    %v1143 = vunpack.c.l.b16 %v831
    %v1144 = vunpack.c.h.b16 %v831
    %v1145 = vunpack.c.l.b16 %v832
    %v1146 = vunpack.c.h.b16 %v832
    %v1147 = vunpack.c.l.b16 %v833
    %v1148 = vunpack.c.h.b16 %v833
    %v1149 = vunpack.c.l.b16 %v834
    %v1150 = vunpack.c.h.b16 %v834
    %v1151 = vunpack.c.l.b16 %v835
    %v1152 = vunpack.c.h.b16 %v835
    %v1153 = vunpack.c.l.b16 %v836
    %v1154 = vunpack.c.h.b16 %v836
    %v1155 = vunpack.c.l.b16 %v837
    %v1156 = vunpack.c.h.b16 %v837
    %v1157 = vunpack.c.l.b16 %v838
    %v1158 = vunpack.c.h.b16 %v838
    %v1159 = vunpack.c.l.b16 %v839
    %v1160 = vunpack.c.h.b16 %v839
    %v1161 = vunpack.c.l.b16 %v840
    %v1162 = vunpack.c.h.b16 %v840
    %v1163 = vunpack.c.l.b16 %v841
    %v1164 = vunpack.c.h.b16 %v841
    %v1165 = vunpack.c.l.b16 %v842
    %v1166 = vunpack.c.h.b16 %v842
    %v1167 = vunpack.c.l.b16 %v843
    %v1168 = vunpack.c.h.b16 %v843
    %v1169 = vunpack.c.l.b16 %v844
    %v1170 = vunpack.c.h.b16 %v844
    %v1171 = vunpack.c.l.b16 %v845
    %v1172 = vunpack.c.h.b16 %v845
    %v1173 = vunpack.c.l.b16 %v846
    %v1174 = vunpack.c.h.b16 %v846
    %v1175 = vunpack.c.l.b16 %v847
    %v1176 = vunpack.c.h.b16 %v847
    %v1177 = vunpack.c.l.b16 %v848
    %v1178 = vunpack.c.h.b16 %v848
    %v1179 = vunpack.c.l.b16 %v849
    %v1180 = vunpack.c.h.b16 %v849
    %v1181 = vunpack.c.l.b16 %v850
    %v1182 = vunpack.c.h.b16 %v850
    %v1183 = vunpack.c.l.b16 %v851
    %v1184 = vunpack.c.h.b16 %v851
    %v1185 = vunpack.c.l.b16 %v852
    %v1186 = vunpack.c.h.b16 %v852
    %v1187 = vunpack.c.l.b16 %v853
    %v1188 = vunpack.c.h.b16 %v853
    %v1189 = vunpack.c.l.b16 %v854
    %v1190 = vunpack.c.h.b16 %v854
    %v1191 = vunpack.c.l.b16 %v855
    %v1192 = vunpack.c.h.b16 %v855
    %v1193 = vunpack.c.l.b16 %v856
    %v1194 = vunpack.c.h.b16 %v856
    %v1195 = vunpack.c.l.b16 %v857
    %v1196 = vunpack.c.h.b16 %v857
    %v1197 = vunpack.c.l.b16 %v858
    %v1198 = vunpack.c.h.b16 %v858
    %v1199 = vunpack.c.l.b16 %v859
    %v1200 = vunpack.c.h.b16 %v859
    %v1201 = vunpack.c.l.b16 %v860
    %v1202 = vunpack.c.h.b16 %v860
    %v1203 = vunpack.c.l.b16 %v861
    %v1204 = vunpack.c.h.b16 %v861
    %v1205 = vunpack.c.l.b16 %v862
    %v1206 = vunpack.c.h.b16 %v862
    %v1207 = vunpack.c.l.b16 %v863
    %v1208 = vunpack.c.h.b16 %v863
    %v1209 = vunpack.c.l.b16 %v864
    %v1210 = vunpack.c.h.b16 %v864
    %v1211 = vunpack.c.l.b16 %v865
    %v1212 = vunpack.c.h.b16 %v865
    %v1213 = vunpack.c.l.b16 %v866
    %v1214 = vunpack.c.h.b16 %v866
    %v1215 = vunpack.c.l.b16 %v867
    %v1216 = vunpack.c.h.b16 %v867
    %v1217 = vunpack.c.l.b16 %v868
    %v1218 = vunpack.c.h.b16 %v868
    %v1219 = vunpack.c.l.b16 %v869
    %v1220 = vunpack.c.h.b16 %v869
    %v1221 = vunpack.c.l.b16 %v870
    %v1222 = vunpack.c.h.b16 %v870
    %v1223 = vunpack.c.l.b16 %v871
    %v1224 = vunpack.c.h.b16 %v871
    %v1225 = vunpack.c.l.b16 %v872
    %v1226 = vunpack.c.h.b16 %v872
    %v1227 = vunpack.c.l.b16 %v873
    %v1228 = vunpack.c.h.b16 %v873
    %v1229 = vunpack.c.l.b16 %v874
    %v1230 = vunpack.c.h.b16 %v874
    %v1231 = vunpack.c.l.b16 %v875
    %v1232 = vunpack.c.h.b16 %v875
    %v1233 = vunpack.c.l.b16 %v876
    %v1234 = vunpack.c.h.b16 %v876
    %v1235 = vunpack.c.l.b16 %v877
    %v1236 = vunpack.c.h.b16 %v877
    %v1237 = vunpack.c.l.b16 %v878
    %v1238 = vunpack.c.h.b16 %v878
    %v1239 = vunpack.c.l.b16 %v879
    %v1240 = vunpack.c.h.b16 %v879
    %v1241 = vunpack.c.l.b16 %v880
    %v1242 = vunpack.c.h.b16 %v880
    %v1243 = vunpack.c.l.b16 %v881
    %v1244 = vunpack.c.h.b16 %v881
    %v1245 = vunpack.c.l.b16 %v882
    %v1246 = vunpack.c.h.b16 %v882
    %v1247 = vunpack.c.l.b16 %v883
    %v1248 = vunpack.c.h.b16 %v883
    %v1249 = vunpack.c.l.b16 %v884
    %v1250 = vunpack.c.h.b16 %v884
    %v1251 = vunpack.c.l.b16 %v885
    %v1252 = vunpack.c.h.b16 %v885
    %v1253 = vunpack.c.l.b16 %v886
    %v1254 = vunpack.c.h.b16 %v886
    %v1255 = vunpack.c.l.b16 %v887
    %v1256 = vunpack.c.h.b16 %v887
    %v1257 = vunpack.c.l.b16 %v888
    %v1258 = vunpack.c.h.b16 %v888
    %v1259 = vunpack.c.l.b16 %v889
    %v1260 = vunpack.c.h.b16 %v889
    %v1261 = vunpack.c.l.b16 %v890
    %v1262 = vunpack.c.h.b16 %v890
    %v1263 = vunpack.c.l.b16 %v891
    %v1264 = vunpack.c.h.b16 %v891
    %v1265 = vunpack.c.l.b16 %v892
    %v1266 = vunpack.c.h.b16 %v892
    %v1267 = vunpack.c.l.b16 %v893
    %v1268 = vunpack.c.h.b16 %v893
    %v1269 = vunpack.c.l.b16 %v894
    %v1270 = vunpack.c.h.b16 %v894
    %v1271 = vunpack.c.l.b16 %v895
    %v1272 = vunpack.c.h.b16 %v895
    %v1273 = vunpack.c.l.b16 %v896
    %v1274 = vunpack.c.h.b16 %v896
    %v1275 = vunpack.c.l.b16 %v897
    %v1276 = vunpack.c.h.b16 %v897
    %v1277 = vunpack.c.l.b16 %v898
    %v1278 = vunpack.c.h.b16 %v898
    %v1279 = vunpack.c.l.b16 %v899
    %v1280 = vunpack.c.h.b16 %v899
    %v1281 = vunpack.c.l.b16 %v900
    %v1282 = vunpack.c.h.b16 %v900
    %v1283 = vunpack.c.l.b16 %v901
    %v1284 = vunpack.c.h.b16 %v901
    %v1285 = vunpack.c.l.b16 %v902
    %v1286 = vunpack.c.h.b16 %v902
    %v1287 = vunpack.c.l.b16 %v903
    %v1288 = vunpack.c.h.b16 %v903
    %v1289 = vunpack.c.l.b16 %v904
    %v1290 = vunpack.c.h.b16 %v904
    %v1291 = vunpack.c.l.b16 %v905
    %v1292 = vunpack.c.h.b16 %v905
    %v1293 = vunpack.c.l.b16 %v906
    %v1294 = vunpack.c.h.b16 %v906
    %v1295 = vunpack.c.l.b16 %v907
    %v1296 = vunpack.c.h.b16 %v907
    %v1297 = vunpack.c.l.b16 %v908
    %v1298 = vunpack.c.h.b16 %v908
    %v1299 = vunpack.c.l.b16 %v909
    %v1300 = vunpack.c.h.b16 %v909
    %v1301 = vunpack.c.l.b16 %v910
    %v1302 = vunpack.c.h.b16 %v910
    %v1303 = vunpack.c.l.b16 %v911
    %v1304 = vunpack.c.h.b16 %v911
    %v1305 = vunpack.c.l.b16 %v912
    %v1306 = vunpack.c.h.b16 %v912
    %v1307 = vunpack.c.l.b16 %v913
    %v1308 = vunpack.c.h.b16 %v913
    %v1309 = vunpack.c.l.b16 %v914
    %v1310 = vunpack.c.h.b16 %v914
    %v1311 = vunpack.c.l.b16 %v915
    %v1312 = vunpack.c.h.b16 %v915
    %v1313 = vunpack.c.l.b16 %v916
    %v1314 = vunpack.c.h.b16 %v916
    %v1315 = vunpack.c.l.b16 %v917
    %v1316 = vunpack.c.h.b16 %v917
    %v1317 = vunpack.c.l.b16 %v918
    %v1318 = vunpack.c.h.b16 %v918
    %v1319 = vunpack.c.l.b16 %v919
    %v1320 = vunpack.c.h.b16 %v919
    %v1321 = vunpack.c.l.b16 %v920
    %v1322 = vunpack.c.h.b16 %v920
    %v1323 = vunpack.c.l.b16 %v921
    %v1324 = vunpack.c.h.b16 %v921
    %v1325 = vunpack.c.l.b16 %v922
    %v1326 = vunpack.c.h.b16 %v922
    %v1327 = vunpack.c.l.b16 %v923
    %v1328 = vunpack.c.h.b16 %v923
    %v1329 = vunpack.c.l.b16 %v924
    %v1330 = vunpack.c.h.b16 %v924
    %v1331 = vpack.c.b16 %v1079, %v1075
    %v1332 = vpack.c.b16 %v1080, %v1076
    %v1333 = vpack.c.b16 %v1081, %v1077
    %v1334 = vpack.c.b16 %v1082, %v1078
    %v1335 = vpack.c.b16 %v1087, %v1083
    %v1336 = vpack.c.b16 %v1088, %v1084
    %v1337 = vpack.c.b16 %v1089, %v1085
    %v1338 = vpack.c.b16 %v1090, %v1086
    %v1339 = vpack.c.b16 %v1095, %v1091
    %v1340 = vpack.c.b16 %v1096, %v1092
    %v1341 = vpack.c.b16 %v1097, %v1093
    %v1342 = vpack.c.b16 %v1098, %v1094
    %v1343 = vpack.c.b16 %v1103, %v1099
    %v1344 = vpack.c.b16 %v1104, %v1100
    %v1345 = vpack.c.b16 %v1105, %v1101
    %v1346 = vpack.c.b16 %v1106, %v1102
    %v1347 = vpack.c.b16 %v1111, %v1107
    %v1348 = vpack.c.b16 %v1112, %v1108
    %v1349 = vpack.c.b16 %v1113, %v1109
    %v1350 = vpack.c.b16 %v1114, %v1110
    %v1351 = vpack.c.b16 %v1119, %v1115
    %v1352 = vpack.c.b16 %v1120, %v1116
    %v1353 = vpack.c.b16 %v1121, %v1117
    %v1354 = vpack.c.b16 %v1122, %v1118
    %v1355 = vpack.c.b16 %v1127, %v1123
    %v1356 = vpack.c.b16 %v1128, %v1124
    %v1357 = vpack.c.b16 %v1129, %v1125
    %v1358 = vpack.c.b16 %v1130, %v1126
    %v1359 = vpack.c.b16 %v1135, %v1131
    %v1360 = vpack.c.b16 %v1136, %v1132
    %v1361 = vpack.c.b16 %v1137, %v1133
    %v1362 = vpack.c.b16 %v1138, %v1134
    %v1363 = vpack.c.b16 %v1143, %v1139
    %v1364 = vpack.c.b16 %v1144, %v1140
    %v1365 = vpack.c.b16 %v1145, %v1141
    %v1366 = vpack.c.b16 %v1146, %v1142
    %v1367 = vpack.c.b16 %v1151, %v1147
    %v1368 = vpack.c.b16 %v1152, %v1148
    %v1369 = vpack.c.b16 %v1153, %v1149
    %v1370 = vpack.c.b16 %v1154, %v1150
    %v1371 = vpack.c.b16 %v1159, %v1155
    %v1372 = vpack.c.b16 %v1160, %v1156
    %v1373 = vpack.c.b16 %v1161, %v1157
    %v1374 = vpack.c.b16 %v1162, %v1158
    %v1375 = vpack.c.b16 %v1167, %v1163
    %v1376 = vpack.c.b16 %v1168, %v1164
    %v1377 = vpack.c.b16 %v1169, %v1165
    %v1378 = vpack.c.b16 %v1170, %v1166
    %v1379 = vpack.c.b16 %v1175, %v1171
    %v1380 = vpack.c.b16 %v1176, %v1172
    %v1381 = vpack.c.b16 %v1177, %v1173
    %v1382 = vpack.c.b16 %v1178, %v1174
    %v1383 = vpack.c.b16 %v1183, %v1179
    %v1384 = vpack.c.b16 %v1184, %v1180
    %v1385 = vpack.c.b16 %v1185, %v1181
    %v1386 = vpack.c.b16 %v1186, %v1182
    %v1387 = vpack.c.b16 %v1191, %v1187
    %v1388 = vpack.c.b16 %v1192, %v1188
    %v1389 = vpack.c.b16 %v1193, %v1189
    %v1390 = vpack.c.b16 %v1194, %v1190
    %v1391 = vpack.c.b16 %v1199, %v1195
    %v1392 = vpack.c.b16 %v1200, %v1196
    %v1393 = vpack.c.b16 %v1201, %v1197
    %v1394 = vpack.c.b16 %v1202, %v1198
    %v1395 = vpack.c.b16 %v1207, %v1203
    %v1396 = vpack.c.b16 %v1208, %v1204
    %v1397 = vpack.c.b16 %v1209, %v1205
    %v1398 = vpack.c.b16 %v1210, %v1206
    %v1399 = vpack.c.b16 %v1215, %v1211
    %v1400 = vpack.c.b16 %v1216, %v1212
    %v1401 = vpack.c.b16 %v1217, %v1213
    %v1402 = vpack.c.b16 %v1218, %v1214
    %v1403 = vpack.c.b16 %v1223, %v1219
    %v1404 = vpack.c.b16 %v1224, %v1220
    %v1405 = vpack.c.b16 %v1225, %v1221
    %v1406 = vpack.c.b16 %v1226, %v1222
    %v1407 = vpack.c.b16 %v1231, %v1227
    %v1408 = vpack.c.b16 %v1232, %v1228
    %v1409 = vpack.c.b16 %v1233, %v1229
    %v1410 = vpack.c.b16 %v1234, %v1230
    %v1411 = vpack.c.b16 %v1239, %v1235
    %v1412 = vpack.c.b16 %v1240, %v1236
    %v1413 = vpack.c.b16 %v1241, %v1237
    %v1414 = vpack.c.b16 %v1242, %v1238
    %v1415 = vpack.c.b16 %v1247, %v1243
    %v1416 = vpack.c.b16 %v1248, %v1244
    %v1417 = vpack.c.b16 %v1249, %v1245
    %v1418 = vpack.c.b16 %v1250, %v1246
    %v1419 = vpack.c.b16 %v1255, %v1251
    %v1420 = vpack.c.b16 %v1256, %v1252
    %v1421 = vpack.c.b16 %v1257, %v1253
    %v1422 = vpack.c.b16 %v1258, %v1254
    %v1423 = vpack.c.b16 %v1263, %v1259
    %v1424 = vpack.c.b16 %v1264, %v1260
    %v1425 = vpack.c.b16 %v1265, %v1261
    %v1426 = vpack.c.b16 %v1266, %v1262
    %v1427 = vpack.c.b16 %v1271, %v1267
    %v1428 = vpack.c.b16 %v1272, %v1268
    %v1429 = vpack.c.b16 %v1273, %v1269
    %v1430 = vpack.c.b16 %v1274, %v1270
    %v1431 = vpack.c.b16 %v1279, %v1275
    %v1432 = vpack.c.b16 %v1280, %v1276
    %v1433 = vpack.c.b16 %v1281, %v1277
    %v1434 = vpack.c.b16 %v1282, %v1278
    %v1435 = vpack.c.b16 %v1287, %v1283
    %v1436 = vpack.c.b16 %v1288, %v1284
    %v1437 = vpack.c.b16 %v1289, %v1285
    %v1438 = vpack.c.b16 %v1290, %v1286
    %v1439 = vpack.c.b16 %v1295, %v1291
    %v1440 = vpack.c.b16 %v1296, %v1292
    %v1441 = vpack.c.b16 %v1297, %v1293
    %v1442 = vpack.c.b16 %v1298, %v1294
    %v1443 = vpack.c.b16 %v1303, %v1299
    %v1444 = vpack.c.b16 %v1304, %v1300
    %v1445 = vpack.c.b16 %v1305, %v1301
    %v1446 = vpack.c.b16 %v1306, %v1302
    %v1447 = vpack.c.b16 %v1311, %v1307
    %v1448 = vpack.c.b16 %v1312, %v1308
    %v1449 = vpack.c.b16 %v1313, %v1309
    %v1450 = vpack.c.b16 %v1314, %v1310
    %v1451 = vpack.c.b16 %v1319, %v1315
    %v1452 = vpack.c.b16 %v1320, %v1316
    %v1453 = vpack.c.b16 %v1321, %v1317
    %v1454 = vpack.c.b16 %v1322, %v1318
    %v1455 = vpack.c.b16 %v1327, %v1323
    %v1456 = vpack.c.b16 %v1328, %v1324
    %v1457 = vpack.c.b16 %v1329, %v1325
    %v1458 = vpack.c.b16 %v1330, %v1326
    %1587 = vmatprep.subr.bf16.mxu0 %v1360
    %1588 = vmatpush1.bf16.msra.mxu0 %v1359
    %1589 = vmatprep.subr.bf16.mxu0 %v1356
    %1590 = vmatpush1.bf16.msra.mxu0 %v1355
    %1591 = vmatprep.subr.bf16.mxu0 %v1352
    %1592 = vmatpush1.bf16.msra.mxu0 %v1351
    %1593 = vmatprep.subr.bf16.mxu0 %v1348
    %1594 = vmatpush1.bf16.msra.mxu0 %v1347
    %1595 = vmatprep.subr.bf16.mxu0 %v1344
    %1596 = vmatpush1.bf16.msra.mxu0 %v1343
    %1597 = vmatprep.subr.bf16.mxu0 %v1340
    %1598 = vmatpush1.bf16.msra.mxu0 %v1339
    %1599 = vmatprep.subr.bf16.mxu0 %v1336
    %1600 = vmatpush1.bf16.msra.mxu0 %v1335
    %1601 = vmatprep.subr.bf16.mxu0 %v1332
    %1602 = vmatpush1.bf16.msra.mxu0 %v1331
    %1603 = vmatprep.subr.bf16.mxu0 %v1392
    %1604 = vmatpush2.bf16.msra.mxu0 %v1391
    %1605 = vmatprep.subr.bf16.mxu0 %v1388
    %1606 = vmatpush2.bf16.msra.mxu0 %v1387
    %1607 = vmatprep.subr.bf16.mxu0 %v1384
    %1608 = vmatpush2.bf16.msra.mxu0 %v1383
    %1609 = vmatprep.subr.bf16.mxu0 %v1380
    %1610 = vmatpush2.bf16.msra.mxu0 %v1379
    %1611 = vmatprep.subr.bf16.mxu0 %v1376
    %1612 = vmatpush2.bf16.msra.mxu0 %v1375
    %1613 = vmatprep.subr.bf16.mxu0 %v1372
    %1614 = vmatpush2.bf16.msra.mxu0 %v1371
    %1615 = vmatprep.subr.bf16.mxu0 %v1368
    %1616 = vmatpush2.bf16.msra.mxu0 %v1367
    %1617 = vmatprep.subr.bf16.mxu0 %v1364
    %1618 = vmatpush2.bf16.msra.mxu0 %v1363
    %1619 = vmatprep.mubr.bf16.mxu0 %v794
    %1620 = vmatmul.mubr.bf16.gmra.mxu0 %v793
    %v1621 = vpop.f32.mrf.mxu0
    %v1622 = vadd.f32 %v930, %v1621
    %v1623 = vpop.f32.mrf.mxu0
    %v1624 = vadd.f32 %v934, %v1623
    %v1625 = vpop.f32.mrf.mxu0
    %v1626 = vadd.f32 %v930, %v1625
    %v1627 = vpop.f32.mrf.mxu0
    %v1628 = vadd.f32 %v934, %v1627
    %1629 = vdwg.mxu0
    %1630 = vmatprep.subr.bf16.mxu0 %v1424
    %1631 = vmatpush1.bf16.msra.mxu0 %v1423
    %1632 = vmatprep.subr.bf16.mxu0 %v1420
    %1633 = vmatpush1.bf16.msra.mxu0 %v1419
    %1634 = vmatprep.subr.bf16.mxu0 %v1416
    %1635 = vmatpush1.bf16.msra.mxu0 %v1415
    %1636 = vmatprep.subr.bf16.mxu0 %v1412
    %1637 = vmatpush1.bf16.msra.mxu0 %v1411
    %1638 = vmatprep.subr.bf16.mxu0 %v1408
    %1639 = vmatpush1.bf16.msra.mxu0 %v1407
    %1640 = vmatprep.subr.bf16.mxu0 %v1404
    %1641 = vmatpush1.bf16.msra.mxu0 %v1403
    %1642 = vmatprep.subr.bf16.mxu0 %v1400
    %1643 = vmatpush1.bf16.msra.mxu0 %v1399
    %1644 = vmatprep.subr.bf16.mxu0 %v1396
    %1645 = vmatpush1.bf16.msra.mxu0 %v1395
    %1646 = vmatprep.subr.bf16.mxu0 %v1456
    %1647 = vmatpush2.bf16.msra.mxu0 %v1455
    %1648 = vmatprep.subr.bf16.mxu0 %v1452
    %1649 = vmatpush2.bf16.msra.mxu0 %v1451
    %1650 = vmatprep.subr.bf16.mxu0 %v1448
    %1651 = vmatpush2.bf16.msra.mxu0 %v1447
    %1652 = vmatprep.subr.bf16.mxu0 %v1444
    %1653 = vmatpush2.bf16.msra.mxu0 %v1443
    %1654 = vmatprep.subr.bf16.mxu0 %v1440
    %1655 = vmatpush2.bf16.msra.mxu0 %v1439
    %1656 = vmatprep.subr.bf16.mxu0 %v1436
    %1657 = vmatpush2.bf16.msra.mxu0 %v1435
    %1658 = vmatprep.subr.bf16.mxu0 %v1432
    %1659 = vmatpush2.bf16.msra.mxu0 %v1431
    %1660 = vmatprep.subr.bf16.mxu0 %v1428
    %1661 = vmatpush2.bf16.msra.mxu0 %v1427
    %1662 = vmatprep.mubr.bf16.mxu0 %v796
    %1663 = vmatmul.mubr.bf16.gmra.mxu0 %v795
    %v1664 = vpop.f32.mrf.mxu0
    %v1665 = vadd.f32 %v1622, %v1664
    %v1666 = vpop.f32.mrf.mxu0
    %v1667 = vadd.f32 %v1624, %v1666
    %v1668 = vpop.f32.mrf.mxu0
    %v1669 = vadd.f32 %v1626, %v1668
    %v1670 = vpop.f32.mrf.mxu0
    %v1671 = vadd.f32 %v1628, %v1670
    %1672 = vdwg.mxu0
    %1673 = vmatprep.subr.bf16.mxu0 %v1362
    %1674 = vmatpush1.bf16.msra.mxu0 %v1361
    %1675 = vmatprep.subr.bf16.mxu0 %v1358
    %1676 = vmatpush1.bf16.msra.mxu0 %v1357
    %1677 = vmatprep.subr.bf16.mxu0 %v1354
    %1678 = vmatpush1.bf16.msra.mxu0 %v1353
    %1679 = vmatprep.subr.bf16.mxu0 %v1350
    %1680 = vmatpush1.bf16.msra.mxu0 %v1349
    %1681 = vmatprep.subr.bf16.mxu0 %v1346
    %1682 = vmatpush1.bf16.msra.mxu0 %v1345
    %1683 = vmatprep.subr.bf16.mxu0 %v1342
    %1684 = vmatpush1.bf16.msra.mxu0 %v1341
    %1685 = vmatprep.subr.bf16.mxu0 %v1338
    %1686 = vmatpush1.bf16.msra.mxu0 %v1337
    %1687 = vmatprep.subr.bf16.mxu0 %v1334
    %1688 = vmatpush1.bf16.msra.mxu0 %v1333
    %1689 = vmatprep.subr.bf16.mxu0 %v1394
    %1690 = vmatpush2.bf16.msra.mxu0 %v1393
    %1691 = vmatprep.subr.bf16.mxu0 %v1390
    %1692 = vmatpush2.bf16.msra.mxu0 %v1389
    %1693 = vmatprep.subr.bf16.mxu0 %v1386
    %1694 = vmatpush2.bf16.msra.mxu0 %v1385
    %1695 = vmatprep.subr.bf16.mxu0 %v1382
    %1696 = vmatpush2.bf16.msra.mxu0 %v1381
    %1697 = vmatprep.subr.bf16.mxu0 %v1378
    %1698 = vmatpush2.bf16.msra.mxu0 %v1377
    %1699 = vmatprep.subr.bf16.mxu0 %v1374
    %1700 = vmatpush2.bf16.msra.mxu0 %v1373
    %1701 = vmatprep.subr.bf16.mxu0 %v1370
    %1702 = vmatpush2.bf16.msra.mxu0 %v1369
    %1703 = vmatprep.subr.bf16.mxu0 %v1366
    %1704 = vmatpush2.bf16.msra.mxu0 %v1365
    %1705 = vmatprep.mubr.bf16.mxu0 %v794
    %1706 = vmatmul.mubr.bf16.gmra.mxu0 %v793
    %v1707 = vpop.f32.mrf.mxu0
    %v1708 = vadd.f32 %v938, %v1707
    %v1709 = vpop.f32.mrf.mxu0
    %v1710 = vadd.f32 %v942, %v1709
    %v1711 = vpop.f32.mrf.mxu0
    %v1712 = vadd.f32 %v938, %v1711
    %v1713 = vpop.f32.mrf.mxu0
    %v1714 = vadd.f32 %v942, %v1713
    %1715 = vdwg.mxu0
    %1716 = vmatprep.subr.bf16.mxu0 %v1426
    %1717 = vmatpush1.bf16.msra.mxu0 %v1425
    %1718 = vmatprep.subr.bf16.mxu0 %v1422
    %1719 = vmatpush1.bf16.msra.mxu0 %v1421
    %1720 = vmatprep.subr.bf16.mxu0 %v1418
    %1721 = vmatpush1.bf16.msra.mxu0 %v1417
    %1722 = vmatprep.subr.bf16.mxu0 %v1414
    %1723 = vmatpush1.bf16.msra.mxu0 %v1413
    %1724 = vmatprep.subr.bf16.mxu0 %v1410
    %1725 = vmatpush1.bf16.msra.mxu0 %v1409
    %1726 = vmatprep.subr.bf16.mxu0 %v1406
    %1727 = vmatpush1.bf16.msra.mxu0 %v1405
    %1728 = vmatprep.subr.bf16.mxu0 %v1402
    %1729 = vmatpush1.bf16.msra.mxu0 %v1401
    %1730 = vmatprep.subr.bf16.mxu0 %v1398
    %1731 = vmatpush1.bf16.msra.mxu0 %v1397
    %1732 = vmatprep.subr.bf16.mxu0 %v1458
    %1733 = vmatpush2.bf16.msra.mxu0 %v1457
    %1734 = vmatprep.subr.bf16.mxu0 %v1454
    %1735 = vmatpush2.bf16.msra.mxu0 %v1453
    %1736 = vmatprep.subr.bf16.mxu0 %v1450
    %1737 = vmatpush2.bf16.msra.mxu0 %v1449
    %1738 = vmatprep.subr.bf16.mxu0 %v1446
    %1739 = vmatpush2.bf16.msra.mxu0 %v1445
    %1740 = vmatprep.subr.bf16.mxu0 %v1442
    %1741 = vmatpush2.bf16.msra.mxu0 %v1441
    %1742 = vmatprep.subr.bf16.mxu0 %v1438
    %1743 = vmatpush2.bf16.msra.mxu0 %v1437
    %1744 = vmatprep.subr.bf16.mxu0 %v1434
    %1745 = vmatpush2.bf16.msra.mxu0 %v1433
    %1746 = vmatprep.subr.bf16.mxu0 %v1430
    %1747 = vmatpush2.bf16.msra.mxu0 %v1429
    %1748 = vmatprep.mubr.bf16.mxu0 %v796
    %1749 = vmatmul.mubr.bf16.gmra.mxu0 %v795
    %v1750 = vpop.f32.mrf.mxu0
    %v1751 = vadd.f32 %v1708, %v1750
    %v1752 = vpop.f32.mrf.mxu0
    %v1753 = vadd.f32 %v1710, %v1752
    %v1754 = vpop.f32.mrf.mxu0
    %v1755 = vadd.f32 %v1712, %v1754
    %v1756 = vpop.f32.mrf.mxu0
    %v1757 = vadd.f32 %v1714, %v1756
    %1758 = vdwg.mxu0
    %v1759 = vmax.f32 %v1665, 0.0
    %v1760 = vmax.f32 %v1667, 0.0
    %v1761 = vmax.f32 %v1751, 0.0
    %v1762 = vmax.f32 %v1753, 0.0
    %v1763 = vmax.f32 %v1669, 0.0
    %v1764 = vmax.f32 %v1671, 0.0
    %v1765 = vmax.f32 %v1755, 0.0
    %v1766 = vmax.f32 %v1757, 0.0
    %v1767 = vpack.c.bf16 %v1763, %v1759
    %v1768 = vpack.c.bf16 %v1764, %v1760
    %v1769 = vpack.c.bf16 %v1765, %v1761
    %v1770 = vpack.c.bf16 %v1766, %v1762
    %v1771 = vld [vmem:[#allocation11] sm:$0xff]
    %v1772 = vld [vmem:[#allocation11 + $0x8] sm:$0xff]
    %v1773 = vld [vmem:[#allocation11 + $0x10] sm:$0xff]
    %v1774 = vld [vmem:[#allocation11 + $0x18] sm:$0xff]
    %v1775 = vld [vmem:[#allocation11 + $0x20] sm:$0xff]
    %v1776 = vld [vmem:[#allocation11 + $0x28] sm:$0xff]
    %v1777 = vld [vmem:[#allocation11 + $0x30] sm:$0xff]
    %v1778 = vld [vmem:[#allocation11 + $0x38] sm:$0xff]
    %v1779 = vld [vmem:[#allocation11 + $0x40] sm:$0xff]
    %v1780 = vld [vmem:[#allocation11 + $0x48] sm:$0xff]
    %v1781 = vld [vmem:[#allocation11 + $0x50] sm:$0xff]
    %v1782 = vld [vmem:[#allocation11 + $0x58] sm:$0xff]
    %v1783 = vld [vmem:[#allocation11 + $0x60] sm:$0xff]
    %v1784 = vld [vmem:[#allocation11 + $0x68] sm:$0xff]
    %v1785 = vld [vmem:[#allocation11 + $0x70] sm:$0xff]
    %v1786 = vld [vmem:[#allocation11 + $0x78] sm:$0xff]
    %v1787 = vld [vmem:[#allocation11 + $0x80] sm:$0xff]
    %v1788 = vld [vmem:[#allocation11 + $0x88] sm:$0xff]
    %v1789 = vld [vmem:[#allocation11 + $0x90] sm:$0xff]
    %v1790 = vld [vmem:[#allocation11 + $0x98] sm:$0xff]
    %v1791 = vld [vmem:[#allocation11 + $0xa0] sm:$0xff]
    %v1792 = vld [vmem:[#allocation11 + $0xa8] sm:$0xff]
    %v1793 = vld [vmem:[#allocation11 + $0xb0] sm:$0xff]
    %v1794 = vld [vmem:[#allocation11 + $0xb8] sm:$0xff]
    %v1795 = vld [vmem:[#allocation11 + $0xc0] sm:$0xff]
    %v1796 = vld [vmem:[#allocation11 + $0xc8] sm:$0xff]
    %v1797 = vld [vmem:[#allocation11 + $0xd0] sm:$0xff]
    %v1798 = vld [vmem:[#allocation11 + $0xd8] sm:$0xff]
    %v1799 = vld [vmem:[#allocation11 + $0xe0] sm:$0xff]
    %v1800 = vld [vmem:[#allocation11 + $0xe8] sm:$0xff]
    %v1801 = vld [vmem:[#allocation11 + $0xf0] sm:$0xff]
    %v1802 = vld [vmem:[#allocation11 + $0xf8] sm:$0xff]
    %v1803 = vld [vmem:[#allocation11 + $0x100] sm:$0xff]
    %v1804 = vld [vmem:[#allocation11 + $0x108] sm:$0xff]
    %v1805 = vld [vmem:[#allocation11 + $0x110] sm:$0xff]
    %v1806 = vld [vmem:[#allocation11 + $0x118] sm:$0xff]
    %v1807 = vld [vmem:[#allocation11 + $0x120] sm:$0xff]
    %v1808 = vld [vmem:[#allocation11 + $0x128] sm:$0xff]
    %v1809 = vld [vmem:[#allocation11 + $0x130] sm:$0xff]
    %v1810 = vld [vmem:[#allocation11 + $0x138] sm:$0xff]
    %v1811 = vld [vmem:[#allocation11 + $0x140] sm:$0xff]
    %v1812 = vld [vmem:[#allocation11 + $0x148] sm:$0xff]
    %v1813 = vld [vmem:[#allocation11 + $0x150] sm:$0xff]
    %v1814 = vld [vmem:[#allocation11 + $0x158] sm:$0xff]
    %v1815 = vld [vmem:[#allocation11 + $0x160] sm:$0xff]
    %v1816 = vld [vmem:[#allocation11 + $0x168] sm:$0xff]
    %v1817 = vld [vmem:[#allocation11 + $0x170] sm:$0xff]
    %v1818 = vld [vmem:[#allocation11 + $0x178] sm:$0xff]
    %v1819 = vld [vmem:[#allocation11 + $0x180] sm:$0xff]
    %v1820 = vld [vmem:[#allocation11 + $0x188] sm:$0xff]
    %v1821 = vld [vmem:[#allocation11 + $0x190] sm:$0xff]
    %v1822 = vld [vmem:[#allocation11 + $0x198] sm:$0xff]
    %v1823 = vld [vmem:[#allocation11 + $0x1a0] sm:$0xff]
    %v1824 = vld [vmem:[#allocation11 + $0x1a8] sm:$0xff]
    %v1825 = vld [vmem:[#allocation11 + $0x1b0] sm:$0xff]
    %v1826 = vld [vmem:[#allocation11 + $0x1b8] sm:$0xff]
    %v1827 = vld [vmem:[#allocation11 + $0x1c0] sm:$0xff]
    %v1828 = vld [vmem:[#allocation11 + $0x1c8] sm:$0xff]
    %v1829 = vld [vmem:[#allocation11 + $0x1d0] sm:$0xff]
    %v1830 = vld [vmem:[#allocation11 + $0x1d8] sm:$0xff]
    %v1831 = vld [vmem:[#allocation11 + $0x1e0] sm:$0xff]
    %v1832 = vld [vmem:[#allocation11 + $0x1e8] sm:$0xff]
    %v1833 = vld [vmem:[#allocation11 + $0x1f0] sm:$0xff]
    %v1834 = vld [vmem:[#allocation11 + $0x1f8] sm:$0xff]
    %v1835 = vld [vmem:[%s8] sm:$0x3]
    %v1837 = vlaneseq
    %v1838 = vshrl.u32 %v1837, 7
    %v1839 = vsub.s32 0, %v1838
    %v1840 = vrot.slane %v1835, %v1839
    %v1841 = vlaneseq
    %v1842 = vshrl.u32 %v1841, 7
    %v1843 = vsub.s32 1, %v1842
    %v1844 = vrot.slane %v1835, %v1843
    %v1911 = vunpack.c.l.b16 %v1771
    %v1912 = vunpack.c.h.b16 %v1771
    %v1913 = vunpack.c.l.b16 %v1772
    %v1914 = vunpack.c.h.b16 %v1772
    %v1915 = vunpack.c.l.b16 %v1773
    %v1916 = vunpack.c.h.b16 %v1773
    %v1917 = vunpack.c.l.b16 %v1774
    %v1918 = vunpack.c.h.b16 %v1774
    %v1919 = vunpack.c.l.b16 %v1775
    %v1920 = vunpack.c.h.b16 %v1775
    %v1921 = vunpack.c.l.b16 %v1776
    %v1922 = vunpack.c.h.b16 %v1776
    %v1923 = vunpack.c.l.b16 %v1777
    %v1924 = vunpack.c.h.b16 %v1777
    %v1925 = vunpack.c.l.b16 %v1778
    %v1926 = vunpack.c.h.b16 %v1778
    %v1927 = vunpack.c.l.b16 %v1779
    %v1928 = vunpack.c.h.b16 %v1779
    %v1929 = vunpack.c.l.b16 %v1780
    %v1930 = vunpack.c.h.b16 %v1780
    %v1931 = vunpack.c.l.b16 %v1781
    %v1932 = vunpack.c.h.b16 %v1781
    %v1933 = vunpack.c.l.b16 %v1782
    %v1934 = vunpack.c.h.b16 %v1782
    %v1935 = vunpack.c.l.b16 %v1783
    %v1936 = vunpack.c.h.b16 %v1783
    %v1937 = vunpack.c.l.b16 %v1784
    %v1938 = vunpack.c.h.b16 %v1784
    %v1939 = vunpack.c.l.b16 %v1785
    %v1940 = vunpack.c.h.b16 %v1785
    %v1941 = vunpack.c.l.b16 %v1786
    %v1942 = vunpack.c.h.b16 %v1786
    %v1943 = vunpack.c.l.b16 %v1787
    %v1944 = vunpack.c.h.b16 %v1787
    %v1945 = vunpack.c.l.b16 %v1788
    %v1946 = vunpack.c.h.b16 %v1788
    %v1947 = vunpack.c.l.b16 %v1789
    %v1948 = vunpack.c.h.b16 %v1789
    %v1949 = vunpack.c.l.b16 %v1790
    %v1950 = vunpack.c.h.b16 %v1790
    %v1951 = vunpack.c.l.b16 %v1791
    %v1952 = vunpack.c.h.b16 %v1791
    %v1953 = vunpack.c.l.b16 %v1792
    %v1954 = vunpack.c.h.b16 %v1792
    %v1955 = vunpack.c.l.b16 %v1793
    %v1956 = vunpack.c.h.b16 %v1793
    %v1957 = vunpack.c.l.b16 %v1794
    %v1958 = vunpack.c.h.b16 %v1794
    %v1959 = vunpack.c.l.b16 %v1795
    %v1960 = vunpack.c.h.b16 %v1795
    %v1961 = vunpack.c.l.b16 %v1796
    %v1962 = vunpack.c.h.b16 %v1796
    %v1963 = vunpack.c.l.b16 %v1797
    %v1964 = vunpack.c.h.b16 %v1797
    %v1965 = vunpack.c.l.b16 %v1798
    %v1966 = vunpack.c.h.b16 %v1798
    %v1967 = vunpack.c.l.b16 %v1799
    %v1968 = vunpack.c.h.b16 %v1799
    %v1969 = vunpack.c.l.b16 %v1800
    %v1970 = vunpack.c.h.b16 %v1800
    %v1971 = vunpack.c.l.b16 %v1801
    %v1972 = vunpack.c.h.b16 %v1801
    %v1973 = vunpack.c.l.b16 %v1802
    %v1974 = vunpack.c.h.b16 %v1802
    %v1975 = vunpack.c.l.b16 %v1803
    %v1976 = vunpack.c.h.b16 %v1803
    %v1977 = vunpack.c.l.b16 %v1804
    %v1978 = vunpack.c.h.b16 %v1804
    %v1979 = vunpack.c.l.b16 %v1805
    %v1980 = vunpack.c.h.b16 %v1805
    %v1981 = vunpack.c.l.b16 %v1806
    %v1982 = vunpack.c.h.b16 %v1806
    %v1983 = vunpack.c.l.b16 %v1807
    %v1984 = vunpack.c.h.b16 %v1807
    %v1985 = vunpack.c.l.b16 %v1808
    %v1986 = vunpack.c.h.b16 %v1808
    %v1987 = vunpack.c.l.b16 %v1809
    %v1988 = vunpack.c.h.b16 %v1809
    %v1989 = vunpack.c.l.b16 %v1810
    %v1990 = vunpack.c.h.b16 %v1810
    %v1991 = vunpack.c.l.b16 %v1811
    %v1992 = vunpack.c.h.b16 %v1811
    %v1993 = vunpack.c.l.b16 %v1812
    %v1994 = vunpack.c.h.b16 %v1812
    %v1995 = vunpack.c.l.b16 %v1813
    %v1996 = vunpack.c.h.b16 %v1813
    %v1997 = vunpack.c.l.b16 %v1814
    %v1998 = vunpack.c.h.b16 %v1814
    %v1999 = vunpack.c.l.b16 %v1815
    %v2000 = vunpack.c.h.b16 %v1815
    %v2001 = vunpack.c.l.b16 %v1816
    %v2002 = vunpack.c.h.b16 %v1816
    %v2003 = vunpack.c.l.b16 %v1817
    %v2004 = vunpack.c.h.b16 %v1817
    %v2005 = vunpack.c.l.b16 %v1818
    %v2006 = vunpack.c.h.b16 %v1818
    %v2007 = vunpack.c.l.b16 %v1819
    %v2008 = vunpack.c.h.b16 %v1819
    %v2009 = vunpack.c.l.b16 %v1820
    %v2010 = vunpack.c.h.b16 %v1820
    %v2011 = vunpack.c.l.b16 %v1821
    %v2012 = vunpack.c.h.b16 %v1821
    %v2013 = vunpack.c.l.b16 %v1822
    %v2014 = vunpack.c.h.b16 %v1822
    %v2015 = vunpack.c.l.b16 %v1823
    %v2016 = vunpack.c.h.b16 %v1823
    %v2017 = vunpack.c.l.b16 %v1824
    %v2018 = vunpack.c.h.b16 %v1824
    %v2019 = vunpack.c.l.b16 %v1825
    %v2020 = vunpack.c.h.b16 %v1825
    %v2021 = vunpack.c.l.b16 %v1826
    %v2022 = vunpack.c.h.b16 %v1826
    %v2023 = vunpack.c.l.b16 %v1827
    %v2024 = vunpack.c.h.b16 %v1827
    %v2025 = vunpack.c.l.b16 %v1828
    %v2026 = vunpack.c.h.b16 %v1828
    %v2027 = vunpack.c.l.b16 %v1829
    %v2028 = vunpack.c.h.b16 %v1829
    %v2029 = vunpack.c.l.b16 %v1830
    %v2030 = vunpack.c.h.b16 %v1830
    %v2031 = vunpack.c.l.b16 %v1831
    %v2032 = vunpack.c.h.b16 %v1831
    %v2033 = vunpack.c.l.b16 %v1832
    %v2034 = vunpack.c.h.b16 %v1832
    %v2035 = vunpack.c.l.b16 %v1833
    %v2036 = vunpack.c.h.b16 %v1833
    %v2037 = vunpack.c.l.b16 %v1834
    %v2038 = vunpack.c.h.b16 %v1834
    %v2039 = vpack.c.b16 %v1913, %v1911
    %v2040 = vpack.c.b16 %v1914, %v1912
    %v2041 = vpack.c.b16 %v1917, %v1915
    %v2042 = vpack.c.b16 %v1918, %v1916
    %v2043 = vpack.c.b16 %v1921, %v1919
    %v2044 = vpack.c.b16 %v1922, %v1920
    %v2045 = vpack.c.b16 %v1925, %v1923
    %v2046 = vpack.c.b16 %v1926, %v1924
    %v2047 = vpack.c.b16 %v1929, %v1927
    %v2048 = vpack.c.b16 %v1930, %v1928
    %v2049 = vpack.c.b16 %v1933, %v1931
    %v2050 = vpack.c.b16 %v1934, %v1932
    %v2051 = vpack.c.b16 %v1937, %v1935
    %v2052 = vpack.c.b16 %v1938, %v1936
    %v2053 = vpack.c.b16 %v1941, %v1939
    %v2054 = vpack.c.b16 %v1942, %v1940
    %v2055 = vpack.c.b16 %v1945, %v1943
    %v2056 = vpack.c.b16 %v1946, %v1944
    %v2057 = vpack.c.b16 %v1949, %v1947
    %v2058 = vpack.c.b16 %v1950, %v1948
    %v2059 = vpack.c.b16 %v1953, %v1951
    %v2060 = vpack.c.b16 %v1954, %v1952
    %v2061 = vpack.c.b16 %v1957, %v1955
    %v2062 = vpack.c.b16 %v1958, %v1956
    %v2063 = vpack.c.b16 %v1961, %v1959
    %v2064 = vpack.c.b16 %v1962, %v1960
    %v2065 = vpack.c.b16 %v1965, %v1963
    %v2066 = vpack.c.b16 %v1966, %v1964
    %v2067 = vpack.c.b16 %v1969, %v1967
    %v2068 = vpack.c.b16 %v1970, %v1968
    %v2069 = vpack.c.b16 %v1973, %v1971
    %v2070 = vpack.c.b16 %v1974, %v1972
    %v2071 = vpack.c.b16 %v1977, %v1975
    %v2072 = vpack.c.b16 %v1978, %v1976
    %v2073 = vpack.c.b16 %v1981, %v1979
    %v2074 = vpack.c.b16 %v1982, %v1980
    %v2075 = vpack.c.b16 %v1985, %v1983
    %v2076 = vpack.c.b16 %v1986, %v1984
    %v2077 = vpack.c.b16 %v1989, %v1987
    %v2078 = vpack.c.b16 %v1990, %v1988
    %v2079 = vpack.c.b16 %v1993, %v1991
    %v2080 = vpack.c.b16 %v1994, %v1992
    %v2081 = vpack.c.b16 %v1997, %v1995
    %v2082 = vpack.c.b16 %v1998, %v1996
    %v2083 = vpack.c.b16 %v2001, %v1999
    %v2084 = vpack.c.b16 %v2002, %v2000
    %v2085 = vpack.c.b16 %v2005, %v2003
    %v2086 = vpack.c.b16 %v2006, %v2004
    %v2087 = vpack.c.b16 %v2009, %v2007
    %v2088 = vpack.c.b16 %v2010, %v2008
    %v2089 = vpack.c.b16 %v2013, %v2011
    %v2090 = vpack.c.b16 %v2014, %v2012
    %v2091 = vpack.c.b16 %v2017, %v2015
    %v2092 = vpack.c.b16 %v2018, %v2016
    %v2093 = vpack.c.b16 %v2021, %v2019
    %v2094 = vpack.c.b16 %v2022, %v2020
    %v2095 = vpack.c.b16 %v2025, %v2023
    %v2096 = vpack.c.b16 %v2026, %v2024
    %v2097 = vpack.c.b16 %v2029, %v2027
    %v2098 = vpack.c.b16 %v2030, %v2028
    %v2099 = vpack.c.b16 %v2033, %v2031
    %v2100 = vpack.c.b16 %v2034, %v2032
    %v2101 = vpack.c.b16 %v2037, %v2035
    %v2102 = vpack.c.b16 %v2038, %v2036
    %2167 = vmatprep.subr.bf16.mxu0 %v2054
    %2168 = vmatpush1.bf16.msra.mxu0 %v2053
    %2169 = vmatprep.subr.bf16.mxu0 %v2052
    %2170 = vmatpush1.bf16.msra.mxu0 %v2051
    %2171 = vmatprep.subr.bf16.mxu0 %v2050
    %2172 = vmatpush1.bf16.msra.mxu0 %v2049
    %2173 = vmatprep.subr.bf16.mxu0 %v2048
    %2174 = vmatpush1.bf16.msra.mxu0 %v2047
    %2175 = vmatprep.subr.bf16.mxu0 %v2046
    %2176 = vmatpush1.bf16.msra.mxu0 %v2045
    %2177 = vmatprep.subr.bf16.mxu0 %v2044
    %2178 = vmatpush1.bf16.msra.mxu0 %v2043
    %2179 = vmatprep.subr.bf16.mxu0 %v2042
    %2180 = vmatpush1.bf16.msra.mxu0 %v2041
    %2181 = vmatprep.subr.bf16.mxu0 %v2040
    %2182 = vmatpush1.bf16.msra.mxu0 %v2039
    %2183 = vmatprep.subr.bf16.mxu0 %v2070
    %2184 = vmatpush2.bf16.msra.mxu0 %v2069
    %2185 = vmatprep.subr.bf16.mxu0 %v2068
    %2186 = vmatpush2.bf16.msra.mxu0 %v2067
    %2187 = vmatprep.subr.bf16.mxu0 %v2066
    %2188 = vmatpush2.bf16.msra.mxu0 %v2065
    %2189 = vmatprep.subr.bf16.mxu0 %v2064
    %2190 = vmatpush2.bf16.msra.mxu0 %v2063
    %2191 = vmatprep.subr.bf16.mxu0 %v2062
    %2192 = vmatpush2.bf16.msra.mxu0 %v2061
    %2193 = vmatprep.subr.bf16.mxu0 %v2060
    %2194 = vmatpush2.bf16.msra.mxu0 %v2059
    %2195 = vmatprep.subr.bf16.mxu0 %v2058
    %2196 = vmatpush2.bf16.msra.mxu0 %v2057
    %2197 = vmatprep.subr.bf16.mxu0 %v2056
    %2198 = vmatpush2.bf16.msra.mxu0 %v2055
    %2199 = vmatprep.mubr.bf16.mxu0 %v1768
    %2200 = vmatmul.mubr.bf16.gmra.mxu0 %v1767
    %v2201 = vpop.f32.mrf.mxu0
    %v2202 = vadd.f32 %v1840, %v2201
    %v2203 = vpop.f32.mrf.mxu0
    %v2204 = vadd.f32 %v1844, %v2203
    %v2205 = vpop.f32.mrf.mxu0
    %v2206 = vadd.f32 %v1840, %v2205
    %v2207 = vpop.f32.mrf.mxu0
    %v2208 = vadd.f32 %v1844, %v2207
    %2209 = vdwg.mxu0
    %2210 = vmatprep.subr.bf16.mxu0 %v2086
    %2211 = vmatpush1.bf16.msra.mxu0 %v2085
    %2212 = vmatprep.subr.bf16.mxu0 %v2084
    %2213 = vmatpush1.bf16.msra.mxu0 %v2083
    %2214 = vmatprep.subr.bf16.mxu0 %v2082
    %2215 = vmatpush1.bf16.msra.mxu0 %v2081
    %2216 = vmatprep.subr.bf16.mxu0 %v2080
    %2217 = vmatpush1.bf16.msra.mxu0 %v2079
    %2218 = vmatprep.subr.bf16.mxu0 %v2078
    %2219 = vmatpush1.bf16.msra.mxu0 %v2077
    %2220 = vmatprep.subr.bf16.mxu0 %v2076
    %2221 = vmatpush1.bf16.msra.mxu0 %v2075
    %2222 = vmatprep.subr.bf16.mxu0 %v2074
    %2223 = vmatpush1.bf16.msra.mxu0 %v2073
    %2224 = vmatprep.subr.bf16.mxu0 %v2072
    %2225 = vmatpush1.bf16.msra.mxu0 %v2071
    %2226 = vmatprep.subr.bf16.mxu0 %v2102
    %2227 = vmatpush2.bf16.msra.mxu0 %v2101
    %2228 = vmatprep.subr.bf16.mxu0 %v2100
    %2229 = vmatpush2.bf16.msra.mxu0 %v2099
    %2230 = vmatprep.subr.bf16.mxu0 %v2098
    %2231 = vmatpush2.bf16.msra.mxu0 %v2097
    %2232 = vmatprep.subr.bf16.mxu0 %v2096
    %2233 = vmatpush2.bf16.msra.mxu0 %v2095
    %2234 = vmatprep.subr.bf16.mxu0 %v2094
    %2235 = vmatpush2.bf16.msra.mxu0 %v2093
    %2236 = vmatprep.subr.bf16.mxu0 %v2092
    %2237 = vmatpush2.bf16.msra.mxu0 %v2091
    %2238 = vmatprep.subr.bf16.mxu0 %v2090
    %2239 = vmatpush2.bf16.msra.mxu0 %v2089
    %2240 = vmatprep.subr.bf16.mxu0 %v2088
    %2241 = vmatpush2.bf16.msra.mxu0 %v2087
    %2242 = vmatprep.mubr.bf16.mxu0 %v1770
    %2243 = vmatmul.mubr.bf16.gmra.mxu0 %v1769
    %v2244 = vpop.f32.mrf.mxu0
    %v2245 = vadd.f32 %v2202, %v2244
    %v2246 = vpop.f32.mrf.mxu0
    %v2247 = vadd.f32 %v2204, %v2246
    %v2248 = vpop.f32.mrf.mxu0
    %v2249 = vadd.f32 %v2206, %v2248
    %v2250 = vpop.f32.mrf.mxu0
    %v2251 = vadd.f32 %v2208, %v2250
    %2252 = vdwg.mxu0
    %v2253 = vmax.f32 %v2245, 0.0
    %v2254 = vmax.f32 %v2247, 0.0
    %v2255 = vmax.f32 %v2249, 0.0
    %v2256 = vmax.f32 %v2251, 0.0
    %v2257 = vpack.c.bf16 %v2255, %v2253
    %v2258 = vpack.c.bf16 %v2256, %v2254
    %v2259 = vld [vmem:[#allocation13] sm:$0xf]
    %v2260 = vld [vmem:[#allocation13 + $0x4] sm:$0xf]
    %v2261 = vld [vmem:[#allocation13 + $0x8] sm:$0xf]
    %v2262 = vld [vmem:[#allocation13 + $0xc] sm:$0xf]
    %v2263 = vld [vmem:[#allocation13 + $0x10] sm:$0xf]
    %v2264 = vld [vmem:[#allocation13 + $0x14] sm:$0xf]
    %v2265 = vld [vmem:[#allocation13 + $0x18] sm:$0xf]
    %v2266 = vld [vmem:[#allocation13 + $0x1c] sm:$0xf]
    %v2267 = vld [vmem:[#allocation13 + $0x20] sm:$0xf]
    %v2268 = vld [vmem:[#allocation13 + $0x24] sm:$0xf]
    %v2269 = vld [vmem:[#allocation13 + $0x28] sm:$0xf]
    %v2270 = vld [vmem:[#allocation13 + $0x2c] sm:$0xf]
    %v2271 = vld [vmem:[#allocation13 + $0x30] sm:$0xf]
    %v2272 = vld [vmem:[#allocation13 + $0x34] sm:$0xf]
    %v2273 = vld [vmem:[#allocation13 + $0x38] sm:$0xf]
    %v2274 = vld [vmem:[#allocation13 + $0x3c] sm:$0xf]
    %v2275 = vld [vmem:[#allocation13 + $0x40] sm:$0xf]
    %v2276 = vld [vmem:[#allocation13 + $0x44] sm:$0xf]
    %v2277 = vld [vmem:[#allocation13 + $0x48] sm:$0xf]
    %v2278 = vld [vmem:[#allocation13 + $0x4c] sm:$0xf]
    %v2279 = vld [vmem:[#allocation13 + $0x50] sm:$0xf]
    %v2280 = vld [vmem:[#allocation13 + $0x54] sm:$0xf]
    %v2281 = vld [vmem:[#allocation13 + $0x58] sm:$0xf]
    %v2282 = vld [vmem:[#allocation13 + $0x5c] sm:$0xf]
    %v2283 = vld [vmem:[#allocation13 + $0x60] sm:$0xf]
    %v2284 = vld [vmem:[#allocation13 + $0x64] sm:$0xf]
    %v2285 = vld [vmem:[#allocation13 + $0x68] sm:$0xf]
    %v2286 = vld [vmem:[#allocation13 + $0x6c] sm:$0xf]
    %v2287 = vld [vmem:[#allocation13 + $0x70] sm:$0xf]
    %v2288 = vld [vmem:[#allocation13 + $0x74] sm:$0xf]
    %v2289 = vld [vmem:[#allocation13 + $0x78] sm:$0xf]
    %v2290 = vld [vmem:[#allocation13 + $0x7c] sm:$0xf]
    %v2291 = vld [vmem:[%s10] sm:$0x1]
    %v2293 = vlaneseq
    %v2294 = vshrl.u32 %v2293, 7
    %v2295 = vsub.s32 0, %v2294
    %v2296 = vrot.slane %v2291, %v2295
    %v2330 = vunpack.c.l.b16 %v2259
    %v2331 = vunpack.c.l.b16 %v2260
    %v2332 = vunpack.c.l.b16 %v2261
    %v2333 = vunpack.c.l.b16 %v2262
    %v2334 = vunpack.c.l.b16 %v2263
    %v2335 = vunpack.c.l.b16 %v2264
    %v2336 = vunpack.c.l.b16 %v2265
    %v2337 = vunpack.c.l.b16 %v2266
    %v2338 = vunpack.c.l.b16 %v2267
    %v2339 = vunpack.c.l.b16 %v2268
    %v2340 = vunpack.c.l.b16 %v2269
    %v2341 = vunpack.c.l.b16 %v2270
    %v2342 = vunpack.c.l.b16 %v2271
    %v2343 = vunpack.c.l.b16 %v2272
    %v2344 = vunpack.c.l.b16 %v2273
    %v2345 = vunpack.c.l.b16 %v2274
    %v2346 = vunpack.c.l.b16 %v2275
    %v2347 = vunpack.c.l.b16 %v2276
    %v2348 = vunpack.c.l.b16 %v2277
    %v2349 = vunpack.c.l.b16 %v2278
    %v2350 = vunpack.c.l.b16 %v2279
    %v2351 = vunpack.c.l.b16 %v2280
    %v2352 = vunpack.c.l.b16 %v2281
    %v2353 = vunpack.c.l.b16 %v2282
    %v2354 = vunpack.c.l.b16 %v2283
    %v2355 = vunpack.c.l.b16 %v2284
    %v2356 = vunpack.c.l.b16 %v2285
    %v2357 = vunpack.c.l.b16 %v2286
    %v2358 = vunpack.c.l.b16 %v2287
    %v2359 = vunpack.c.l.b16 %v2288
    %v2360 = vunpack.c.l.b16 %v2289
    %v2361 = vunpack.c.l.b16 %v2290
    %v2362 = vpack.c.b16 %v2331, %v2330
    %v2363 = vpack.c.b16 %v2333, %v2332
    %v2364 = vpack.c.b16 %v2335, %v2334
    %v2365 = vpack.c.b16 %v2337, %v2336
    %v2366 = vpack.c.b16 %v2339, %v2338
    %v2367 = vpack.c.b16 %v2341, %v2340
    %v2368 = vpack.c.b16 %v2343, %v2342
    %v2369 = vpack.c.b16 %v2345, %v2344
    %v2370 = vpack.c.b16 %v2347, %v2346
    %v2371 = vpack.c.b16 %v2349, %v2348
    %v2372 = vpack.c.b16 %v2351, %v2350
    %v2373 = vpack.c.b16 %v2353, %v2352
    %v2374 = vpack.c.b16 %v2355, %v2354
    %v2375 = vpack.c.b16 %v2357, %v2356
    %v2376 = vpack.c.b16 %v2359, %v2358
    %v2377 = vpack.c.b16 %v2361, %v2360
    %2394 = vmatprep.subr.bf16.mxu0 0
    %2395 = vmatpush1.bf16.msra.mxu0 %v2369
    %2396 = vmatprep.subr.bf16.mxu0 0
    %2397 = vmatpush1.bf16.msra.mxu0 %v2368
    %2398 = vmatprep.subr.bf16.mxu0 0
    %2399 = vmatpush1.bf16.msra.mxu0 %v2367
    %2400 = vmatprep.subr.bf16.mxu0 0
    %2401 = vmatpush1.bf16.msra.mxu0 %v2366
    %2402 = vmatprep.subr.bf16.mxu0 0
    %2403 = vmatpush1.bf16.msra.mxu0 %v2365
    %2404 = vmatprep.subr.bf16.mxu0 0
    %2405 = vmatpush1.bf16.msra.mxu0 %v2364
    %2406 = vmatprep.subr.bf16.mxu0 0
    %2407 = vmatpush1.bf16.msra.mxu0 %v2363
    %2408 = vmatprep.subr.bf16.mxu0 0
    %2409 = vmatpush1.bf16.msra.mxu0 %v2362
    %2410 = vmatprep.subr.bf16.mxu0 0
    %2411 = vmatpush2.bf16.msra.mxu0 %v2377
    %2412 = vmatprep.subr.bf16.mxu0 0
    %2413 = vmatpush2.bf16.msra.mxu0 %v2376
    %2414 = vmatprep.subr.bf16.mxu0 0
    %2415 = vmatpush2.bf16.msra.mxu0 %v2375
    %2416 = vmatprep.subr.bf16.mxu0 0
    %2417 = vmatpush2.bf16.msra.mxu0 %v2374
    %2418 = vmatprep.subr.bf16.mxu0 0
    %2419 = vmatpush2.bf16.msra.mxu0 %v2373
    %2420 = vmatprep.subr.bf16.mxu0 0
    %2421 = vmatpush2.bf16.msra.mxu0 %v2372
    %2422 = vmatprep.subr.bf16.mxu0 0
    %2423 = vmatpush2.bf16.msra.mxu0 %v2371
    %2424 = vmatprep.subr.bf16.mxu0 0
    %2425 = vmatpush2.bf16.msra.mxu0 %v2370
    %2426 = vmatprep.mubr.bf16.mxu0 %v2258
    %2427 = vmatmul.mubr.bf16.gmra.mxu0 %v2257
    %v2428 = vpop.f32.mrf.mxu0
    %v2429 = vadd.f32 %v2296, %v2428
    %v2430 = vpop.f32.mrf.mxu0
    %v2431 = vpop.f32.mrf.mxu0
    %v2432 = vadd.f32 %v2296, %v2431
    %v2433 = vpop.f32.mrf.mxu0
    %2434 = vdwg.mxu0
    %2435 = vst [vmem:[#allocation14] sm:$0xff] %v2429
    %2436 = vst [vmem:[#allocation14 + $0x8] sm:$0xff] %v2432
    // Predicated region
    $region74: #{tpu_custom_call.1} parent=1 // pred_check
      _
    $region75: #{tpu_custom_call.1} parent=1 // pred_check_branch
      %2438 = sbr.rel (0) target = $region77
    $region76: #{tpu_custom_call.1} parent=1 // pred_region
      %s2440 = ssub.s32 256, 256
      %2441 = vsyncadd [#allocation4], %s2440
      %s2442 = sshll.u32 [#allocation14], 4
      %s2443 = int_to_ptr.vmem [resolvable:$true] %s2442
      %2448 = dma.vmem_to_hbm [thread:$0]  %s2443, 256, %s11, [#allocation4], 128, 128, 8
    $region77: #{tpu_custom_call.1} parent=1 // pred_fallthru
      _
    // Predicated region
    $region78: #{tpu_custom_call.1} parent=1 // pred_check
      _
    $region79: #{tpu_custom_call.1} parent=1 // pred_check_branch
      %2450 = sbr.rel (0) target = $region81
    $region80: #{tpu_custom_call.1} parent=1 // pred_region
      %2451 = dma.done [#allocation4], 256
    $region81: #{tpu_custom_call.1} parent=1 // pred_fallthru
      _
    %2452 = vsyncpa [#allocation3], 1
    %2453 = vsyncpa [#allocation6], 1
    %2454 = vsyncpa [#allocation9], 1
    %2455 = vsyncpa [#allocation12], 1
    %2456 = vsyncpa [#allocation4], 1

</llo_original>
